<compile_context>
chip_gen: v7x
topology: tpu7x:2x2x1
jax: 0.10.0
libtpu: 0.0.40
codegen_flags: <defaults>
</compile_context>

<pallas_src>
import jax
import jax.numpy as jnp
from jax.experimental import pallas as pl
from jax.experimental.pallas import tpu as pltpu  # noqa: F401  (TPU backend)

# ----------------------------- configuration --------------------------------
B        = 2            # batch
C        = 3            # image channels (CLIP uses RGB)
IMG      = 16           # spatial size
PATCH    = 8            # patch size (stride of conv1)
GRID     = IMG // PATCH
N_PATCH  = GRID * GRID  # 4 patches
SEQ      = N_PATCH + 1  # +1 CLS token -> 5 real tokens
SEQ_P    = 8            # sequence padded to a sublane multiple
D        = 32           # hidden width (real)
HEADS    = 2
HEAD_DIM = D // HEADS   # 16
MLP      = 4 * D        # 128 (already lane-dense)
OUT_DIM  = 16           # projection / embedding dim (real)
LAYERS   = 2
EPS      = 1e-5
K_PATCH  = C * PATCH * PATCH     # 192 = flattened patch length

# lane-dense padded sizes
DP   = 128              # padded hidden
KP   = K_PATCH          # 192: contraction dim only needs 8-alignment
OUTP = 128              # padded projection dim
T    = B * SEQ_P        # 16 flattened (batch x padded-seq) token rows
NEG  = -1e30            # additive mask value (avoids inf-inf NaNs)


# ------------------------------- fused kernel --------------------------------
def clip_fused_kernel(patches_ref, w_patch_ref, base_ref, gvec_ref, bias_ref,
                      vec_ref, wqkv_ref, wout_ref, wmlp_ref, proj_ref,
                      out_ref):
    inv_d = 1.0 / D
    bf16 = jnp.bfloat16

    def ln(x, g, b):
        # LayerNorm over the real D lanes.  Pad lanes of x are exactly zero,
        # so sum(x)/D and sum(x*x)/D equal the real-lane statistics; g/b are
        # zero in pad lanes so the padded region stays exactly zero.
        mean = jnp.sum(x, axis=-1, keepdims=True) * inv_d
        msq  = jnp.sum(x * x, axis=-1, keepdims=True) * inv_d
        var  = msq - mean * mean
        return (x - mean) * jax.lax.rsqrt(var + EPS) * g + b

    gv        = gvec_ref[...]        # [8, DP]   ln_pre/ln_post gamma/beta + head masks
    attn_bias = bias_ref[...]        # [T, T]    block-diag + pad-key additive mask

    # ---- patch embedding (conv1 as matmul) + CLS/positional base ----------
    # patches: [T, KP]; per batch, row 0 is a zero "CLS patch" and rows 5..7
    # are zero pad tokens.  base holds cls+pos (zero on pad rows / pad lanes).
    x = jnp.dot(patches_ref[...].astype(bf16), w_patch_ref[...],
                preferred_element_type=jnp.float32)                  # [T, DP]
    x = x + base_ref[...].astype(jnp.float32)

    x = ln(x, gv[0:1, :], gv[1:2, :])                                # ln_pre

    for layer in range(LAYERS):                 # static 2-iteration unroll
        V = vec_ref[layer]                      # [16, DP]
        ln1_g, ln1_b = V[0:1, :], V[1:2, :]
        ln2_g, ln2_b = V[2:3, :], V[3:4, :]
        qb, kb, vb   = V[4:5, :], V[5:6, :], V[6:7, :]   # 1/sqrt(hd) folded in qb
        out_b, fc1_b, fc2_b = V[7:8, :], V[8:9, :], V[9:10, :]

        # ---- multi-head self-attention (pre-LN) ----
        h = ln(x, ln1_g, ln1_b)
        # one wide dot per layer: RHS = [DP, 3*DP] (q | k | v column blocks)
        qkv = jnp.dot(h.astype(bf16), wqkv_ref[layer],
                      preferred_element_type=jnp.float32)            # [T, 3*DP]
        q = qkv[:, 0 * DP:1 * DP] + qb          # 128-aligned slices (free)
        k = qkv[:, 1 * DP:2 * DP] + kb
        v = qkv[:, 2 * DP:3 * DP] + vb

        ctx = jnp.zeros((T, DP), jnp.float32)
        for hd in range(HEADS):                 # heads isolated by lane masks
            hm = gv[4 + hd:5 + hd, :]           # [1, DP] 0/1 mask of this head's lanes
            # masked q zeroes the other head's lanes, so the full-DP
            # contraction equals the per-head (16-lane) contraction.
            s = jax.lax.dot_general(q * hm, k, (((1,), (1,)), ((), ())),
                                    preferred_element_type=jnp.float32)  # [T, T]
            s = s + attn_bias                   # block-diag batches + mask pad keys
            s = s - jnp.max(s, axis=-1, keepdims=True)
            p = jnp.exp(s)
            p = p * pl.reciprocal(jnp.sum(p, axis=-1, keepdims=True),
                                  approx=True)
            # head-h context lands in head-h lanes -> summing heads == concat
            ctx = ctx + jnp.dot(p, v * hm, preferred_element_type=jnp.float32)

        # single concat(heads) @ W_out matmul
        x = x + jnp.dot(ctx.astype(bf16), wout_ref[layer],
                        preferred_element_type=jnp.float32) + out_b

        # ---- MLP (pre-LN, QuickGELU) ----
        h2 = ln(x, ln2_g, ln2_b)
        m = jnp.dot(h2.astype(bf16), wmlp_ref[layer, 0],
                    preferred_element_type=jnp.float32) + fc1_b
        m = m * jax.nn.sigmoid(1.702 * m)       # QuickGELU (as in CLIP)
        m = jnp.dot(m.astype(bf16), wmlp_ref[layer, 1],
                    preferred_element_type=jnp.float32) + fc2_b
        x = x + m

    # ---- ln_post + visual projection on ALL rows (no in-kernel row gather;
    #      the CLS rows are picked out by the host wrapper) ----
    y = ln(x, gv[2:3, :], gv[3:4, :])
    out_ref[...] = jnp.dot(y.astype(bf16), proj_ref[...],
                           preferred_element_type=jnp.float32)        # [T, OUTP]


# ------------------------------ host-side packing -----------------------------
def _pad2(a, rows, cols):
    return jnp.pad(a, ((0, rows - a.shape[0]), (0, cols - a.shape[1])))


def pack_params(p):
    """Pad / consolidate the logical weights into lane-dense kernel operands."""
    bf16 = jnp.bfloat16
    scale = 1.0 / (HEAD_DIM ** 0.5)

    # conv1 weight [D, C, P, P] -> [K_PATCH, D] -> [KP, DP] (bf16)
    w_patch = _pad2(p["w_conv"].reshape(D, K_PATCH).T, KP, DP).astype(bf16)

    # CLS + positional embedding base, padded to SEQ_P rows, tiled over batch
    base_s = p["pos_emb"].at[0].add(p["class_emb"])               # [SEQ, D]
    base_s = _pad2(base_s, SEQ_P, DP)                             # [SEQ_P, DP]
    base = jnp.tile(base_s, (B, 1)).astype(bf16)                  # [T, DP]

    # ln_pre / ln_post gamma & beta + per-head 0/1 lane masks (fp32, tiny)
    gvec = jnp.zeros((8, DP), jnp.float32)
    gvec = gvec.at[0, :D].set(p["ln_pre_g"]).at[1, :D].set(p["ln_pre_b"])
    gvec = gvec.at[2, :D].set(p["ln_post_g"]).at[3, :D].set(p["ln_post_b"])
    lanes = jnp.arange(DP)
    for h in range(HEADS):
        hm = ((lanes >= h * HEAD_DIM) & (lanes < (h + 1) * HEAD_DIM))
        gvec = gvec.at[4 + h].set(hm.astype(jnp.float32))

    # block-diagonal (same batch) + pad-key additive attention mask [T, T]
    qi = jnp.arange(T)[:, None]
    kj = jnp.arange(T)[None, :]
    valid = (qi // SEQ_P == kj // SEQ_P) & ((kj % SEQ_P) < SEQ)
    attn_bias = jnp.where(valid, 0.0, NEG).astype(jnp.float32)

    proj = _pad2(p["proj"], DP, OUTP).astype(bf16)

    vecs, wqkv, wout, wmlp = [], [], [], []
    for lp in p["layers"]:
        v = jnp.zeros((16, DP), jnp.float32)
        v = v.at[0, :D].set(lp["ln1_g"]).at[1, :D].set(lp["ln1_b"])
        v = v.at[2, :D].set(lp["ln2_g"]).at[3, :D].set(lp["ln2_b"])
        v = v.at[4, :D].set(lp["qkv_b"][0 * D:1 * D] * scale)   # q bias (scaled)
        v = v.at[5, :D].set(lp["qkv_b"][1 * D:2 * D])           # k bias
        v = v.at[6, :D].set(lp["qkv_b"][2 * D:3 * D])           # v bias
        v = v.at[7, :D].set(lp["out_b"])
        v = v.at[8, :MLP].set(lp["fc1_b"])
        v = v.at[9, :D].set(lp["fc2_b"])
        vecs.append(v)

        # one wide QKV slab per layer: [DP, 3*DP], scale folded into Wq
        wq = _pad2(lp["qkv_w"][:, 0 * D:1 * D] * scale, DP, DP)
        wk = _pad2(lp["qkv_w"][:, 1 * D:2 * D], DP, DP)
        wv = _pad2(lp["qkv_w"][:, 2 * D:3 * D], DP, DP)
        wqkv.append(jnp.concatenate([wq, wk, wv], axis=1).astype(bf16))

        wout.append(_pad2(lp["out_w"], DP, DP).astype(bf16))    # [DP, DP]
        wmlp.append(jnp.stack([_pad2(lp["fc1_w"], DP, MLP),
                               _pad2(lp["fc2_w"], MLP, DP)]).astype(bf16))

    return {
        "w_patch": w_patch,                 # [KP, DP]          bf16
        "base": base,                       # [T, DP]           bf16
        "gvec": gvec,                       # [8, DP]           f32
        "attn_bias": attn_bias,             # [T, T]            f32
        "proj": proj,                       # [DP, OUTP]        bf16
        "vec": jnp.stack(vecs),             # [LAYERS, 16, DP]  f32
        "wqkv": jnp.stack(wqkv),            # [LAYERS, DP, 3DP] bf16
        "wout": jnp.stack(wout),            # [LAYERS, DP, DP]  bf16
        "wmlp": jnp.stack(wmlp),            # [LAYERS, 2, 128, 128] bf16
    }


# ------------------------------ forward wrapper -------------------------------
@jax.jit
def encode_image(image, kp):
    # ---- patchify NCHW (conv1 with stride=PATCH as a matmul) — JAX glue ----
    x = image.reshape(B, C, GRID, PATCH, GRID, PATCH)
    x = x.transpose(0, 2, 4, 1, 3, 5)                    # B, gh, gw, C, ph, pw
    patches = x.reshape(B, N_PATCH, K_PATCH).astype(jnp.float32)
    # row 0 per batch = zero "CLS patch", rows SEQ..SEQ_P-1 = zero pad tokens
    tok = jnp.zeros((B, SEQ_P, K_PATCH), jnp.float32)
    tok = tok.at[:, 1:1 + N_PATCH, :].set(patches)
    tok = tok.reshape(T, K_PATCH)                        # [T, KP]

    out = pl.pallas_call(
        clip_fused_kernel,
        out_shape=jax.ShapeDtypeStruct((T, OUTP), jnp.float32),
    )(tok, kp["w_patch"], kp["base"], kp["gvec"], kp["attn_bias"],
      kp["vec"], kp["wqkv"], kp["wout"], kp["wmlp"], kp["proj"])

    # pick the CLS rows (row 0 of each batch block) and the real output dims
    return out.reshape(B, SEQ_P, OUTP)[:, 0, :OUT_DIM]


# ------------------------- deterministic parameters --------------------------
def init_params(key):
    keys = iter(jax.random.split(key, 64))

    def nrm(shape, scale=0.02):
        return (scale * jax.random.normal(next(keys), shape)).astype(jnp.float32)

    params = {
        "w_conv":    nrm((D, C, PATCH, PATCH)),          # conv1 weight (no bias)
        "class_emb": nrm((D,)),
        "pos_emb":   nrm((SEQ, D)),
        "ln_pre_g":  jnp.ones((D,), jnp.float32),
        "ln_pre_b":  jnp.zeros((D,), jnp.float32),
        "ln_post_g": jnp.ones((D,), jnp.float32),
        "ln_post_b": jnp.zeros((D,), jnp.float32),
        "proj":      nrm((D, OUT_DIM)),
        "layers":    [],
    }
    for _ in range(LAYERS):
        params["layers"].append({
            "ln1_g": jnp.ones((D,), jnp.float32),
            "ln1_b": jnp.zeros((D,), jnp.float32),
            "qkv_w": nrm((D, 3 * D)),
            "qkv_b": nrm((3 * D,)),
            "out_w": nrm((D, D)),
            "out_b": nrm((D,)),
            "ln2_g": jnp.ones((D,), jnp.float32),
            "ln2_b": jnp.zeros((D,), jnp.float32),
            "fc1_w": nrm((D, MLP)),
            "fc1_b": nrm((MLP,)),
            "fc2_w": nrm((MLP, D)),
            "fc2_b": nrm((D,)),
        })
    return params


# --------------------------------- main ---------------------------------------
if __name__ == "__main__":
    root = jax.random.PRNGKey(0)
    k_img, k_par = jax.random.split(root)
    image = jax.random.normal(k_img, (B, C, IMG, IMG), dtype=jnp.float32)
    params = init_params(k_par)
    packed = pack_params(params)

    out = encode_image(image, packed)
    out = jax.block_until_ready(out)
    assert out.shape == (B, OUT_DIM), out.shape
    assert jnp.all(jnp.isfinite(out))
    print("KERNEL_OK")
</pallas_src>

<mosaic_0001>
module attributes {stable_mosaic.version = 11 : i64} {
  func.func @clip_fused_kernel(%arg0: memref<16x192xf32, #tpu.memory_space<vmem>>, %arg1: memref<192x128xbf16, #tpu.memory_space<vmem>>, %arg2: memref<16x128xbf16, #tpu.memory_space<vmem>>, %arg3: memref<8x128xf32, #tpu.memory_space<vmem>>, %arg4: memref<16x16xf32, #tpu.memory_space<vmem>>, %arg5: memref<2x16x128xf32, #tpu.memory_space<vmem>>, %arg6: memref<2x128x384xbf16, #tpu.memory_space<vmem>>, %arg7: memref<2x128x128xbf16, #tpu.memory_space<vmem>>, %arg8: memref<2x2x128x128xbf16, #tpu.memory_space<vmem>>, %arg9: memref<128x128xbf16, #tpu.memory_space<vmem>>, %arg10: memref<16x128xf32, #tpu.memory_space<vmem>>) attributes {dimension_semantics = [], scalar_prefetch = 0 : i64, scratch_operands = 0 : i64, tpu.core_type = #tpu.core_type<tc>} {
    %c0 = arith.constant 0 : index
    %c0_0 = arith.constant 0 : index
    %0 = vector.load %arg3[%c0, %c0_0] : memref<8x128xf32, #tpu.memory_space<vmem>>, vector<8x128xf32>
    %c0_1 = arith.constant 0 : index
    %c0_2 = arith.constant 0 : index
    %1 = vector.load %arg4[%c0_1, %c0_2] : memref<16x16xf32, #tpu.memory_space<vmem>>, vector<16x16xf32>
    %c0_3 = arith.constant 0 : index
    %c0_4 = arith.constant 0 : index
    %2 = vector.load %arg0[%c0_3, %c0_4] : memref<16x192xf32, #tpu.memory_space<vmem>>, vector<16x192xf32>
    %3 = arith.truncf %2 : vector<16x192xf32> to vector<16x192xbf16>
    %c0_5 = arith.constant 0 : index
    %c0_6 = arith.constant 0 : index
    %4 = vector.load %arg1[%c0_5, %c0_6] : memref<192x128xbf16, #tpu.memory_space<vmem>>, vector<192x128xbf16>
    %cst = arith.constant dense<0.000000e+00> : vector<16x128xf32>
    %5 = tpu.matmul %3, %4, %cst {dimension_numbers = #tpu.dot_dimension_numbers<[1], [0], [0], [1], [0, 0, 1, 1], [], []>} : vector<16x192xbf16>, vector<192x128xbf16>, vector<16x128xf32> -> vector<16x128xf32>
    %c0_7 = arith.constant 0 : index
    %c0_8 = arith.constant 0 : index
    %6 = vector.load %arg2[%c0_7, %c0_8] : memref<16x128xbf16, #tpu.memory_space<vmem>>, vector<16x128xbf16>
    %7 = arith.extf %6 : vector<16x128xbf16> to vector<16x128xf32>
    %8 = arith.addf %5, %7 : vector<16x128xf32>
    %9 = vector.extract_strided_slice %0 {offsets = [0, 0], sizes = [1, 128], strides = [1, 1]} : vector<8x128xf32> to vector<1x128xf32>
    %10 = vector.extract_strided_slice %0 {offsets = [1, 0], sizes = [1, 128], strides = [1, 1]} : vector<8x128xf32> to vector<1x128xf32>
    %cst_9 = arith.constant dense<0.000000e+00> : vector<16xf32>
    %11 = vector.multi_reduction <add>, %8, %cst_9 [1] : vector<16x128xf32> to vector<16xf32>
    %12 = vector.shape_cast %11 : vector<16xf32> to vector<16x1xf32>
    %cst_10 = arith.constant 3.125000e-02 : f32
    %13 = vector.broadcast %cst_10 : f32 to vector<16x1xf32>
    %14 = arith.mulf %12, %13 : vector<16x1xf32>
    %15 = arith.mulf %8, %8 : vector<16x128xf32>
    %cst_11 = arith.constant dense<0.000000e+00> : vector<16xf32>
    %16 = vector.multi_reduction <add>, %15, %cst_11 [1] : vector<16x128xf32> to vector<16xf32>
    %17 = vector.shape_cast %16 : vector<16xf32> to vector<16x1xf32>
    %cst_12 = arith.constant 3.125000e-02 : f32
    %18 = vector.broadcast %cst_12 : f32 to vector<16x1xf32>
    %19 = arith.mulf %17, %18 : vector<16x1xf32>
    %20 = arith.mulf %14, %14 : vector<16x1xf32>
    %21 = arith.subf %19, %20 : vector<16x1xf32>
    %22 = vector.broadcast %14 : vector<16x1xf32> to vector<16x128xf32>
    %23 = arith.subf %8, %22 : vector<16x128xf32>
    %cst_13 = arith.constant 9.99999974E-6 : f32
    %24 = vector.broadcast %cst_13 : f32 to vector<16x1xf32>
    %25 = arith.addf %21, %24 : vector<16x1xf32>
    %26 = math.rsqrt %25 : vector<16x1xf32>
    %27 = vector.broadcast %26 : vector<16x1xf32> to vector<16x128xf32>
    %28 = arith.mulf %23, %27 : vector<16x128xf32>
    %29 = vector.broadcast %9 : vector<1x128xf32> to vector<16x128xf32>
    %30 = arith.mulf %28, %29 : vector<16x128xf32>
    %31 = vector.broadcast %10 : vector<1x128xf32> to vector<16x128xf32>
    %32 = arith.addf %30, %31 : vector<16x128xf32>
    %c0_14 = arith.constant 0 : index
    %c0_15 = arith.constant 0 : index
    %c0_16 = arith.constant 0 : index
    %33 = vector.load %arg5[%c0_14, %c0_15, %c0_16] : memref<2x16x128xf32, #tpu.memory_space<vmem>>, vector<1x16x128xf32>
    %34 = vector.shape_cast %33 : vector<1x16x128xf32> to vector<16x128xf32>
    %35 = vector.extract_strided_slice %34 {offsets = [0, 0], sizes = [1, 128], strides = [1, 1]} : vector<16x128xf32> to vector<1x128xf32>
    %36 = vector.extract_strided_slice %34 {offsets = [1, 0], sizes = [1, 128], strides = [1, 1]} : vector<16x128xf32> to vector<1x128xf32>
    %37 = vector.extract_strided_slice %34 {offsets = [2, 0], sizes = [1, 128], strides = [1, 1]} : vector<16x128xf32> to vector<1x128xf32>
    %38 = vector.extract_strided_slice %34 {offsets = [3, 0], sizes = [1, 128], strides = [1, 1]} : vector<16x128xf32> to vector<1x128xf32>
    %39 = vector.extract_strided_slice %34 {offsets = [4, 0], sizes = [1, 128], strides = [1, 1]} : vector<16x128xf32> to vector<1x128xf32>
    %40 = vector.extract_strided_slice %34 {offsets = [5, 0], sizes = [1, 128], strides = [1, 1]} : vector<16x128xf32> to vector<1x128xf32>
    %41 = vector.extract_strided_slice %34 {offsets = [6, 0], sizes = [1, 128], strides = [1, 1]} : vector<16x128xf32> to vector<1x128xf32>
    %42 = vector.extract_strided_slice %34 {offsets = [7, 0], sizes = [1, 128], strides = [1, 1]} : vector<16x128xf32> to vector<1x128xf32>
    %43 = vector.extract_strided_slice %34 {offsets = [8, 0], sizes = [1, 128], strides = [1, 1]} : vector<16x128xf32> to vector<1x128xf32>
    %44 = vector.extract_strided_slice %34 {offsets = [9, 0], sizes = [1, 128], strides = [1, 1]} : vector<16x128xf32> to vector<1x128xf32>
    %cst_17 = arith.constant dense<0.000000e+00> : vector<16xf32>
    %45 = vector.multi_reduction <add>, %32, %cst_17 [1] : vector<16x128xf32> to vector<16xf32>
    %46 = vector.shape_cast %45 : vector<16xf32> to vector<16x1xf32>
    %cst_18 = arith.constant 3.125000e-02 : f32
    %47 = vector.broadcast %cst_18 : f32 to vector<16x1xf32>
    %48 = arith.mulf %46, %47 : vector<16x1xf32>
    %49 = arith.mulf %32, %32 : vector<16x128xf32>
    %cst_19 = arith.constant dense<0.000000e+00> : vector<16xf32>
    %50 = vector.multi_reduction <add>, %49, %cst_19 [1] : vector<16x128xf32> to vector<16xf32>
    %51 = vector.shape_cast %50 : vector<16xf32> to vector<16x1xf32>
    %cst_20 = arith.constant 3.125000e-02 : f32
    %52 = vector.broadcast %cst_20 : f32 to vector<16x1xf32>
    %53 = arith.mulf %51, %52 : vector<16x1xf32>
    %54 = arith.mulf %48, %48 : vector<16x1xf32>
    %55 = arith.subf %53, %54 : vector<16x1xf32>
    %56 = vector.broadcast %48 : vector<16x1xf32> to vector<16x128xf32>
    %57 = arith.subf %32, %56 : vector<16x128xf32>
    %cst_21 = arith.constant 9.99999974E-6 : f32
    %58 = vector.broadcast %cst_21 : f32 to vector<16x1xf32>
    %59 = arith.addf %55, %58 : vector<16x1xf32>
    %60 = math.rsqrt %59 : vector<16x1xf32>
    %61 = vector.broadcast %60 : vector<16x1xf32> to vector<16x128xf32>
    %62 = arith.mulf %57, %61 : vector<16x128xf32>
    %63 = vector.broadcast %35 : vector<1x128xf32> to vector<16x128xf32>
    %64 = arith.mulf %62, %63 : vector<16x128xf32>
    %65 = vector.broadcast %36 : vector<1x128xf32> to vector<16x128xf32>
    %66 = arith.addf %64, %65 : vector<16x128xf32>
    %67 = arith.truncf %66 : vector<16x128xf32> to vector<16x128xbf16>
    %c0_22 = arith.constant 0 : index
    %c0_23 = arith.constant 0 : index
    %c0_24 = arith.constant 0 : index
    %68 = vector.load %arg6[%c0_22, %c0_23, %c0_24] : memref<2x128x384xbf16, #tpu.memory_space<vmem>>, vector<1x128x384xbf16>
    %69 = vector.shape_cast %68 : vector<1x128x384xbf16> to vector<128x384xbf16>
    %cst_25 = arith.constant dense<0.000000e+00> : vector<16x384xf32>
    %70 = tpu.matmul %67, %69, %cst_25 {dimension_numbers = #tpu.dot_dimension_numbers<[1], [0], [0], [1], [0, 0, 1, 1], [], []>} : vector<16x128xbf16>, vector<128x384xbf16>, vector<16x384xf32> -> vector<16x384xf32>
    %71 = vector.extract_strided_slice %70 {offsets = [0, 0], sizes = [16, 128], strides = [1, 1]} : vector<16x384xf32> to vector<16x128xf32>
    %72 = vector.broadcast %39 : vector<1x128xf32> to vector<16x128xf32>
    %73 = arith.addf %71, %72 : vector<16x128xf32>
    %74 = vector.extract_strided_slice %70 {offsets = [0, 128], sizes = [16, 128], strides = [1, 1]} : vector<16x384xf32> to vector<16x128xf32>
    %75 = vector.broadcast %40 : vector<1x128xf32> to vector<16x128xf32>
    %76 = arith.addf %74, %75 : vector<16x128xf32>
    %77 = vector.extract_strided_slice %70 {offsets = [0, 256], sizes = [16, 128], strides = [1, 1]} : vector<16x384xf32> to vector<16x128xf32>
    %78 = vector.broadcast %41 : vector<1x128xf32> to vector<16x128xf32>
    %79 = arith.addf %77, %78 : vector<16x128xf32>
    %cst_26 = arith.constant 0.000000e+00 : f32
    %80 = vector.broadcast %cst_26 : f32 to vector<16x128xf32>
    %81 = vector.extract_strided_slice %0 {offsets = [4, 0], sizes = [1, 128], strides = [1, 1]} : vector<8x128xf32> to vector<1x128xf32>
    %82 = vector.broadcast %81 : vector<1x128xf32> to vector<16x128xf32>
    %83 = arith.mulf %73, %82 : vector<16x128xf32>
    %cst_27 = arith.constant dense<0.000000e+00> : vector<16x16xf32>
    %84 = tpu.matmul %83, %76, %cst_27 {dimension_numbers = #tpu.dot_dimension_numbers<[1], [1], [0], [0], [0, 0, 1, 0], [], []>} : vector<16x128xf32>, vector<16x128xf32>, vector<16x16xf32> -> vector<16x16xf32>
    %85 = arith.addf %84, %1 : vector<16x16xf32>
    %cst_28 = arith.constant dense<0xFF800000> : vector<16xf32>
    %86 = vector.multi_reduction <maximumf>, %85, %cst_28 [1] : vector<16x16xf32> to vector<16xf32>
    %87 = vector.shape_cast %86 : vector<16xf32> to vector<16x1xf32>
    %88 = vector.broadcast %87 : vector<16x1xf32> to vector<16x16xf32>
    %89 = arith.subf %85, %88 : vector<16x16xf32>
    %90 = math.exp %89 : vector<16x16xf32>
    %cst_29 = arith.constant dense<0.000000e+00> : vector<16xf32>
    %91 = vector.multi_reduction <add>, %90, %cst_29 [1] : vector<16x16xf32> to vector<16xf32>
    %92 = vector.shape_cast %91 : vector<16xf32> to vector<16x1xf32>
    %93 = tpu.reciprocal %92 {approx = true} : vector<16x1xf32> -> vector<16x1xf32>
    %94 = vector.broadcast %93 : vector<16x1xf32> to vector<16x16xf32>
    %95 = arith.mulf %90, %94 : vector<16x16xf32>
    %96 = vector.broadcast %81 : vector<1x128xf32> to vector<16x128xf32>
    %97 = arith.mulf %79, %96 : vector<16x128xf32>
    %cst_30 = arith.constant dense<0.000000e+00> : vector<16x128xf32>
    %98 = tpu.matmul %95, %97, %cst_30 {dimension_numbers = #tpu.dot_dimension_numbers<[1], [0], [0], [1], [0, 0, 1, 1], [], []>} : vector<16x16xf32>, vector<16x128xf32>, vector<16x128xf32> -> vector<16x128xf32>
    %99 = arith.addf %80, %98 : vector<16x128xf32>
    %100 = vector.extract_strided_slice %0 {offsets = [5, 0], sizes = [1, 128], strides = [1, 1]} : vector<8x128xf32> to vector<1x128xf32>
    %101 = vector.broadcast %100 : vector<1x128xf32> to vector<16x128xf32>
    %102 = arith.mulf %73, %101 : vector<16x128xf32>
    %cst_31 = arith.constant dense<0.000000e+00> : vector<16x16xf32>
    %103 = tpu.matmul %102, %76, %cst_31 {dimension_numbers = #tpu.dot_dimension_numbers<[1], [1], [0], [0], [0, 0, 1, 0], [], []>} : vector<16x128xf32>, vector<16x128xf32>, vector<16x16xf32> -> vector<16x16xf32>
    %104 = arith.addf %103, %1 : vector<16x16xf32>
    %cst_32 = arith.constant dense<0xFF800000> : vector<16xf32>
    %105 = vector.multi_reduction <maximumf>, %104, %cst_32 [1] : vector<16x16xf32> to vector<16xf32>
    %106 = vector.shape_cast %105 : vector<16xf32> to vector<16x1xf32>
    %107 = vector.broadcast %106 : vector<16x1xf32> to vector<16x16xf32>
    %108 = arith.subf %104, %107 : vector<16x16xf32>
    %109 = math.exp %108 : vector<16x16xf32>
    %cst_33 = arith.constant dense<0.000000e+00> : vector<16xf32>
    %110 = vector.multi_reduction <add>, %109, %cst_33 [1] : vector<16x16xf32> to vector<16xf32>
    %111 = vector.shape_cast %110 : vector<16xf32> to vector<16x1xf32>
    %112 = tpu.reciprocal %111 {approx = true} : vector<16x1xf32> -> vector<16x1xf32>
    %113 = vector.broadcast %112 : vector<16x1xf32> to vector<16x16xf32>
    %114 = arith.mulf %109, %113 : vector<16x16xf32>
    %115 = vector.broadcast %100 : vector<1x128xf32> to vector<16x128xf32>
    %116 = arith.mulf %79, %115 : vector<16x128xf32>
    %cst_34 = arith.constant dense<0.000000e+00> : vector<16x128xf32>
    %117 = tpu.matmul %114, %116, %cst_34 {dimension_numbers = #tpu.dot_dimension_numbers<[1], [0], [0], [1], [0, 0, 1, 1], [], []>} : vector<16x16xf32>, vector<16x128xf32>, vector<16x128xf32> -> vector<16x128xf32>
    %118 = arith.addf %99, %117 : vector<16x128xf32>
    %119 = arith.truncf %118 : vector<16x128xf32> to vector<16x128xbf16>
    %c0_35 = arith.constant 0 : index
    %c0_36 = arith.constant 0 : index
    %c0_37 = arith.constant 0 : index
    %120 = vector.load %arg7[%c0_35, %c0_36, %c0_37] : memref<2x128x128xbf16, #tpu.memory_space<vmem>>, vector<1x128x128xbf16>
    %121 = vector.shape_cast %120 : vector<1x128x128xbf16> to vector<128x128xbf16>
    %cst_38 = arith.constant dense<0.000000e+00> : vector<16x128xf32>
    %122 = tpu.matmul %119, %121, %cst_38 {dimension_numbers = #tpu.dot_dimension_numbers<[1], [0], [0], [1], [0, 0, 1, 1], [], []>} : vector<16x128xbf16>, vector<128x128xbf16>, vector<16x128xf32> -> vector<16x128xf32>
    %123 = arith.addf %32, %122 : vector<16x128xf32>
    %124 = vector.broadcast %42 : vector<1x128xf32> to vector<16x128xf32>
    %125 = arith.addf %123, %124 : vector<16x128xf32>
    %cst_39 = arith.constant dense<0.000000e+00> : vector<16xf32>
    %126 = vector.multi_reduction <add>, %125, %cst_39 [1] : vector<16x128xf32> to vector<16xf32>
    %127 = vector.shape_cast %126 : vector<16xf32> to vector<16x1xf32>
    %cst_40 = arith.constant 3.125000e-02 : f32
    %128 = vector.broadcast %cst_40 : f32 to vector<16x1xf32>
    %129 = arith.mulf %127, %128 : vector<16x1xf32>
    %130 = arith.mulf %125, %125 : vector<16x128xf32>
    %cst_41 = arith.constant dense<0.000000e+00> : vector<16xf32>
    %131 = vector.multi_reduction <add>, %130, %cst_41 [1] : vector<16x128xf32> to vector<16xf32>
    %132 = vector.shape_cast %131 : vector<16xf32> to vector<16x1xf32>
    %cst_42 = arith.constant 3.125000e-02 : f32
    %133 = vector.broadcast %cst_42 : f32 to vector<16x1xf32>
    %134 = arith.mulf %132, %133 : vector<16x1xf32>
    %135 = arith.mulf %129, %129 : vector<16x1xf32>
    %136 = arith.subf %134, %135 : vector<16x1xf32>
    %137 = vector.broadcast %129 : vector<16x1xf32> to vector<16x128xf32>
    %138 = arith.subf %125, %137 : vector<16x128xf32>
    %cst_43 = arith.constant 9.99999974E-6 : f32
    %139 = vector.broadcast %cst_43 : f32 to vector<16x1xf32>
    %140 = arith.addf %136, %139 : vector<16x1xf32>
    %141 = math.rsqrt %140 : vector<16x1xf32>
    %142 = vector.broadcast %141 : vector<16x1xf32> to vector<16x128xf32>
    %143 = arith.mulf %138, %142 : vector<16x128xf32>
    %144 = vector.broadcast %37 : vector<1x128xf32> to vector<16x128xf32>
    %145 = arith.mulf %143, %144 : vector<16x128xf32>
    %146 = vector.broadcast %38 : vector<1x128xf32> to vector<16x128xf32>
    %147 = arith.addf %145, %146 : vector<16x128xf32>
    %148 = arith.truncf %147 : vector<16x128xf32> to vector<16x128xbf16>
    %c0_44 = arith.constant 0 : index
    %c0_45 = arith.constant 0 : index
    %c0_46 = arith.constant 0 : index
    %c0_47 = arith.constant 0 : index
    %149 = vector.load %arg8[%c0_44, %c0_45, %c0_46, %c0_47] : memref<2x2x128x128xbf16, #tpu.memory_space<vmem>>, vector<1x1x128x128xbf16>
    %150 = vector.shape_cast %149 : vector<1x1x128x128xbf16> to vector<128x128xbf16>
    %cst_48 = arith.constant dense<0.000000e+00> : vector<16x128xf32>
    %151 = tpu.matmul %148, %150, %cst_48 {dimension_numbers = #tpu.dot_dimension_numbers<[1], [0], [0], [1], [0, 0, 1, 1], [], []>} : vector<16x128xbf16>, vector<128x128xbf16>, vector<16x128xf32> -> vector<16x128xf32>
    %152 = vector.broadcast %43 : vector<1x128xf32> to vector<16x128xf32>
    %153 = arith.addf %151, %152 : vector<16x128xf32>
    %cst_49 = arith.constant 1.702000e+00 : f32
    %154 = vector.broadcast %cst_49 : f32 to vector<16x128xf32>
    %155 = arith.mulf %154, %153 : vector<16x128xf32>
    %156 = arith.negf %155 : vector<16x128xf32>
    %157 = math.exp %156 : vector<16x128xf32>
    %cst_50 = arith.constant 1.000000e+00 : f32
    %158 = vector.broadcast %cst_50 : f32 to vector<16x128xf32>
    %159 = arith.addf %158, %157 : vector<16x128xf32>
    %160 = arith.divf %158, %159 : vector<16x128xf32>
    %161 = arith.mulf %153, %160 : vector<16x128xf32>
    %162 = arith.truncf %161 : vector<16x128xf32> to vector<16x128xbf16>
    %c0_51 = arith.constant 0 : index
    %c1 = arith.constant 1 : index
    %c0_52 = arith.constant 0 : index
    %c0_53 = arith.constant 0 : index
    %163 = vector.load %arg8[%c0_51, %c1, %c0_52, %c0_53] : memref<2x2x128x128xbf16, #tpu.memory_space<vmem>>, vector<1x1x128x128xbf16>
    %164 = vector.shape_cast %163 : vector<1x1x128x128xbf16> to vector<128x128xbf16>
    %cst_54 = arith.constant dense<0.000000e+00> : vector<16x128xf32>
    %165 = tpu.matmul %162, %164, %cst_54 {dimension_numbers = #tpu.dot_dimension_numbers<[1], [0], [0], [1], [0, 0, 1, 1], [], []>} : vector<16x128xbf16>, vector<128x128xbf16>, vector<16x128xf32> -> vector<16x128xf32>
    %166 = vector.broadcast %44 : vector<1x128xf32> to vector<16x128xf32>
    %167 = arith.addf %165, %166 : vector<16x128xf32>
    %168 = arith.addf %125, %167 : vector<16x128xf32>
    %c1_55 = arith.constant 1 : index
    %c0_56 = arith.constant 0 : index
    %c0_57 = arith.constant 0 : index
    %169 = vector.load %arg5[%c1_55, %c0_56, %c0_57] : memref<2x16x128xf32, #tpu.memory_space<vmem>>, vector<1x16x128xf32>
    %170 = vector.shape_cast %169 : vector<1x16x128xf32> to vector<16x128xf32>
    %171 = vector.extract_strided_slice %170 {offsets = [0, 0], sizes = [1, 128], strides = [1, 1]} : vector<16x128xf32> to vector<1x128xf32>
    %172 = vector.extract_strided_slice %170 {offsets = [1, 0], sizes = [1, 128], strides = [1, 1]} : vector<16x128xf32> to vector<1x128xf32>
    %173 = vector.extract_strided_slice %170 {offsets = [2, 0], sizes = [1, 128], strides = [1, 1]} : vector<16x128xf32> to vector<1x128xf32>
    %174 = vector.extract_strided_slice %170 {offsets = [3, 0], sizes = [1, 128], strides = [1, 1]} : vector<16x128xf32> to vector<1x128xf32>
    %175 = vector.extract_strided_slice %170 {offsets = [4, 0], sizes = [1, 128], strides = [1, 1]} : vector<16x128xf32> to vector<1x128xf32>
    %176 = vector.extract_strided_slice %170 {offsets = [5, 0], sizes = [1, 128], strides = [1, 1]} : vector<16x128xf32> to vector<1x128xf32>
    %177 = vector.extract_strided_slice %170 {offsets = [6, 0], sizes = [1, 128], strides = [1, 1]} : vector<16x128xf32> to vector<1x128xf32>
    %178 = vector.extract_strided_slice %170 {offsets = [7, 0], sizes = [1, 128], strides = [1, 1]} : vector<16x128xf32> to vector<1x128xf32>
    %179 = vector.extract_strided_slice %170 {offsets = [8, 0], sizes = [1, 128], strides = [1, 1]} : vector<16x128xf32> to vector<1x128xf32>
    %180 = vector.extract_strided_slice %170 {offsets = [9, 0], sizes = [1, 128], strides = [1, 1]} : vector<16x128xf32> to vector<1x128xf32>
    %cst_58 = arith.constant dense<0.000000e+00> : vector<16xf32>
    %181 = vector.multi_reduction <add>, %168, %cst_58 [1] : vector<16x128xf32> to vector<16xf32>
    %182 = vector.shape_cast %181 : vector<16xf32> to vector<16x1xf32>
    %cst_59 = arith.constant 3.125000e-02 : f32
    %183 = vector.broadcast %cst_59 : f32 to vector<16x1xf32>
    %184 = arith.mulf %182, %183 : vector<16x1xf32>
    %185 = arith.mulf %168, %168 : vector<16x128xf32>
    %cst_60 = arith.constant dense<0.000000e+00> : vector<16xf32>
    %186 = vector.multi_reduction <add>, %185, %cst_60 [1] : vector<16x128xf32> to vector<16xf32>
    %187 = vector.shape_cast %186 : vector<16xf32> to vector<16x1xf32>
    %cst_61 = arith.constant 3.125000e-02 : f32
    %188 = vector.broadcast %cst_61 : f32 to vector<16x1xf32>
    %189 = arith.mulf %187, %188 : vector<16x1xf32>
    %190 = arith.mulf %184, %184 : vector<16x1xf32>
    %191 = arith.subf %189, %190 : vector<16x1xf32>
    %192 = vector.broadcast %184 : vector<16x1xf32> to vector<16x128xf32>
    %193 = arith.subf %168, %192 : vector<16x128xf32>
    %cst_62 = arith.constant 9.99999974E-6 : f32
    %194 = vector.broadcast %cst_62 : f32 to vector<16x1xf32>
    %195 = arith.addf %191, %194 : vector<16x1xf32>
    %196 = math.rsqrt %195 : vector<16x1xf32>
    %197 = vector.broadcast %196 : vector<16x1xf32> to vector<16x128xf32>
    %198 = arith.mulf %193, %197 : vector<16x128xf32>
    %199 = vector.broadcast %171 : vector<1x128xf32> to vector<16x128xf32>
    %200 = arith.mulf %198, %199 : vector<16x128xf32>
    %201 = vector.broadcast %172 : vector<1x128xf32> to vector<16x128xf32>
    %202 = arith.addf %200, %201 : vector<16x128xf32>
    %203 = arith.truncf %202 : vector<16x128xf32> to vector<16x128xbf16>
    %c1_63 = arith.constant 1 : index
    %c0_64 = arith.constant 0 : index
    %c0_65 = arith.constant 0 : index
    %204 = vector.load %arg6[%c1_63, %c0_64, %c0_65] : memref<2x128x384xbf16, #tpu.memory_space<vmem>>, vector<1x128x384xbf16>
    %205 = vector.shape_cast %204 : vector<1x128x384xbf16> to vector<128x384xbf16>
    %cst_66 = arith.constant dense<0.000000e+00> : vector<16x384xf32>
    %206 = tpu.matmul %203, %205, %cst_66 {dimension_numbers = #tpu.dot_dimension_numbers<[1], [0], [0], [1], [0, 0, 1, 1], [], []>} : vector<16x128xbf16>, vector<128x384xbf16>, vector<16x384xf32> -> vector<16x384xf32>
    %207 = vector.extract_strided_slice %206 {offsets = [0, 0], sizes = [16, 128], strides = [1, 1]} : vector<16x384xf32> to vector<16x128xf32>
    %208 = vector.broadcast %175 : vector<1x128xf32> to vector<16x128xf32>
    %209 = arith.addf %207, %208 : vector<16x128xf32>
    %210 = vector.extract_strided_slice %206 {offsets = [0, 128], sizes = [16, 128], strides = [1, 1]} : vector<16x384xf32> to vector<16x128xf32>
    %211 = vector.broadcast %176 : vector<1x128xf32> to vector<16x128xf32>
    %212 = arith.addf %210, %211 : vector<16x128xf32>
    %213 = vector.extract_strided_slice %206 {offsets = [0, 256], sizes = [16, 128], strides = [1, 1]} : vector<16x384xf32> to vector<16x128xf32>
    %214 = vector.broadcast %177 : vector<1x128xf32> to vector<16x128xf32>
    %215 = arith.addf %213, %214 : vector<16x128xf32>
    %cst_67 = arith.constant 0.000000e+00 : f32
    %216 = vector.broadcast %cst_67 : f32 to vector<16x128xf32>
    %217 = vector.extract_strided_slice %0 {offsets = [4, 0], sizes = [1, 128], strides = [1, 1]} : vector<8x128xf32> to vector<1x128xf32>
    %218 = vector.broadcast %217 : vector<1x128xf32> to vector<16x128xf32>
    %219 = arith.mulf %209, %218 : vector<16x128xf32>
    %cst_68 = arith.constant dense<0.000000e+00> : vector<16x16xf32>
    %220 = tpu.matmul %219, %212, %cst_68 {dimension_numbers = #tpu.dot_dimension_numbers<[1], [1], [0], [0], [0, 0, 1, 0], [], []>} : vector<16x128xf32>, vector<16x128xf32>, vector<16x16xf32> -> vector<16x16xf32>
    %221 = arith.addf %220, %1 : vector<16x16xf32>
    %cst_69 = arith.constant dense<0xFF800000> : vector<16xf32>
    %222 = vector.multi_reduction <maximumf>, %221, %cst_69 [1] : vector<16x16xf32> to vector<16xf32>
    %223 = vector.shape_cast %222 : vector<16xf32> to vector<16x1xf32>
    %224 = vector.broadcast %223 : vector<16x1xf32> to vector<16x16xf32>
    %225 = arith.subf %221, %224 : vector<16x16xf32>
    %226 = math.exp %225 : vector<16x16xf32>
    %cst_70 = arith.constant dense<0.000000e+00> : vector<16xf32>
    %227 = vector.multi_reduction <add>, %226, %cst_70 [1] : vector<16x16xf32> to vector<16xf32>
    %228 = vector.shape_cast %227 : vector<16xf32> to vector<16x1xf32>
    %229 = tpu.reciprocal %228 {approx = true} : vector<16x1xf32> -> vector<16x1xf32>
    %230 = vector.broadcast %229 : vector<16x1xf32> to vector<16x16xf32>
    %231 = arith.mulf %226, %230 : vector<16x16xf32>
    %232 = vector.broadcast %217 : vector<1x128xf32> to vector<16x128xf32>
    %233 = arith.mulf %215, %232 : vector<16x128xf32>
    %cst_71 = arith.constant dense<0.000000e+00> : vector<16x128xf32>
    %234 = tpu.matmul %231, %233, %cst_71 {dimension_numbers = #tpu.dot_dimension_numbers<[1], [0], [0], [1], [0, 0, 1, 1], [], []>} : vector<16x16xf32>, vector<16x128xf32>, vector<16x128xf32> -> vector<16x128xf32>
    %235 = arith.addf %216, %234 : vector<16x128xf32>
    %236 = vector.extract_strided_slice %0 {offsets = [5, 0], sizes = [1, 128], strides = [1, 1]} : vector<8x128xf32> to vector<1x128xf32>
    %237 = vector.broadcast %236 : vector<1x128xf32> to vector<16x128xf32>
    %238 = arith.mulf %209, %237 : vector<16x128xf32>
    %cst_72 = arith.constant dense<0.000000e+00> : vector<16x16xf32>
    %239 = tpu.matmul %238, %212, %cst_72 {dimension_numbers = #tpu.dot_dimension_numbers<[1], [1], [0], [0], [0, 0, 1, 0], [], []>} : vector<16x128xf32>, vector<16x128xf32>, vector<16x16xf32> -> vector<16x16xf32>
    %240 = arith.addf %239, %1 : vector<16x16xf32>
    %cst_73 = arith.constant dense<0xFF800000> : vector<16xf32>
    %241 = vector.multi_reduction <maximumf>, %240, %cst_73 [1] : vector<16x16xf32> to vector<16xf32>
    %242 = vector.shape_cast %241 : vector<16xf32> to vector<16x1xf32>
    %243 = vector.broadcast %242 : vector<16x1xf32> to vector<16x16xf32>
    %244 = arith.subf %240, %243 : vector<16x16xf32>
    %245 = math.exp %244 : vector<16x16xf32>
    %cst_74 = arith.constant dense<0.000000e+00> : vector<16xf32>
    %246 = vector.multi_reduction <add>, %245, %cst_74 [1] : vector<16x16xf32> to vector<16xf32>
    %247 = vector.shape_cast %246 : vector<16xf32> to vector<16x1xf32>
    %248 = tpu.reciprocal %247 {approx = true} : vector<16x1xf32> -> vector<16x1xf32>
    %249 = vector.broadcast %248 : vector<16x1xf32> to vector<16x16xf32>
    %250 = arith.mulf %245, %249 : vector<16x16xf32>
    %251 = vector.broadcast %236 : vector<1x128xf32> to vector<16x128xf32>
    %252 = arith.mulf %215, %251 : vector<16x128xf32>
    %cst_75 = arith.constant dense<0.000000e+00> : vector<16x128xf32>
    %253 = tpu.matmul %250, %252, %cst_75 {dimension_numbers = #tpu.dot_dimension_numbers<[1], [0], [0], [1], [0, 0, 1, 1], [], []>} : vector<16x16xf32>, vector<16x128xf32>, vector<16x128xf32> -> vector<16x128xf32>
    %254 = arith.addf %235, %253 : vector<16x128xf32>
    %255 = arith.truncf %254 : vector<16x128xf32> to vector<16x128xbf16>
    %c1_76 = arith.constant 1 : index
    %c0_77 = arith.constant 0 : index
    %c0_78 = arith.constant 0 : index
    %256 = vector.load %arg7[%c1_76, %c0_77, %c0_78] : memref<2x128x128xbf16, #tpu.memory_space<vmem>>, vector<1x128x128xbf16>
    %257 = vector.shape_cast %256 : vector<1x128x128xbf16> to vector<128x128xbf16>
    %cst_79 = arith.constant dense<0.000000e+00> : vector<16x128xf32>
    %258 = tpu.matmul %255, %257, %cst_79 {dimension_numbers = #tpu.dot_dimension_numbers<[1], [0], [0], [1], [0, 0, 1, 1], [], []>} : vector<16x128xbf16>, vector<128x128xbf16>, vector<16x128xf32> -> vector<16x128xf32>
    %259 = arith.addf %168, %258 : vector<16x128xf32>
    %260 = vector.broadcast %178 : vector<1x128xf32> to vector<16x128xf32>
    %261 = arith.addf %259, %260 : vector<16x128xf32>
    %cst_80 = arith.constant dense<0.000000e+00> : vector<16xf32>
    %262 = vector.multi_reduction <add>, %261, %cst_80 [1] : vector<16x128xf32> to vector<16xf32>
    %263 = vector.shape_cast %262 : vector<16xf32> to vector<16x1xf32>
    %cst_81 = arith.constant 3.125000e-02 : f32
    %264 = vector.broadcast %cst_81 : f32 to vector<16x1xf32>
    %265 = arith.mulf %263, %264 : vector<16x1xf32>
    %266 = arith.mulf %261, %261 : vector<16x128xf32>
    %cst_82 = arith.constant dense<0.000000e+00> : vector<16xf32>
    %267 = vector.multi_reduction <add>, %266, %cst_82 [1] : vector<16x128xf32> to vector<16xf32>
    %268 = vector.shape_cast %267 : vector<16xf32> to vector<16x1xf32>
    %cst_83 = arith.constant 3.125000e-02 : f32
    %269 = vector.broadcast %cst_83 : f32 to vector<16x1xf32>
    %270 = arith.mulf %268, %269 : vector<16x1xf32>
    %271 = arith.mulf %265, %265 : vector<16x1xf32>
    %272 = arith.subf %270, %271 : vector<16x1xf32>
    %273 = vector.broadcast %265 : vector<16x1xf32> to vector<16x128xf32>
    %274 = arith.subf %261, %273 : vector<16x128xf32>
    %cst_84 = arith.constant 9.99999974E-6 : f32
    %275 = vector.broadcast %cst_84 : f32 to vector<16x1xf32>
    %276 = arith.addf %272, %275 : vector<16x1xf32>
    %277 = math.rsqrt %276 : vector<16x1xf32>
    %278 = vector.broadcast %277 : vector<16x1xf32> to vector<16x128xf32>
    %279 = arith.mulf %274, %278 : vector<16x128xf32>
    %280 = vector.broadcast %173 : vector<1x128xf32> to vector<16x128xf32>
    %281 = arith.mulf %279, %280 : vector<16x128xf32>
    %282 = vector.broadcast %174 : vector<1x128xf32> to vector<16x128xf32>
    %283 = arith.addf %281, %282 : vector<16x128xf32>
    %284 = arith.truncf %283 : vector<16x128xf32> to vector<16x128xbf16>
    %c1_85 = arith.constant 1 : index
    %c0_86 = arith.constant 0 : index
    %c0_87 = arith.constant 0 : index
    %c0_88 = arith.constant 0 : index
    %285 = vector.load %arg8[%c1_85, %c0_86, %c0_87, %c0_88] : memref<2x2x128x128xbf16, #tpu.memory_space<vmem>>, vector<1x1x128x128xbf16>
    %286 = vector.shape_cast %285 : vector<1x1x128x128xbf16> to vector<128x128xbf16>
    %cst_89 = arith.constant dense<0.000000e+00> : vector<16x128xf32>
    %287 = tpu.matmul %284, %286, %cst_89 {dimension_numbers = #tpu.dot_dimension_numbers<[1], [0], [0], [1], [0, 0, 1, 1], [], []>} : vector<16x128xbf16>, vector<128x128xbf16>, vector<16x128xf32> -> vector<16x128xf32>
    %288 = vector.broadcast %179 : vector<1x128xf32> to vector<16x128xf32>
    %289 = arith.addf %287, %288 : vector<16x128xf32>
    %cst_90 = arith.constant 1.702000e+00 : f32
    %290 = vector.broadcast %cst_90 : f32 to vector<16x128xf32>
    %291 = arith.mulf %290, %289 : vector<16x128xf32>
    %292 = arith.negf %291 : vector<16x128xf32>
    %293 = math.exp %292 : vector<16x128xf32>
    %cst_91 = arith.constant 1.000000e+00 : f32
    %294 = vector.broadcast %cst_91 : f32 to vector<16x128xf32>
    %295 = arith.addf %294, %293 : vector<16x128xf32>
    %296 = arith.divf %294, %295 : vector<16x128xf32>
    %297 = arith.mulf %289, %296 : vector<16x128xf32>
    %298 = arith.truncf %297 : vector<16x128xf32> to vector<16x128xbf16>
    %c1_92 = arith.constant 1 : index
    %c1_93 = arith.constant 1 : index
    %c0_94 = arith.constant 0 : index
    %c0_95 = arith.constant 0 : index
    %299 = vector.load %arg8[%c1_92, %c1_93, %c0_94, %c0_95] : memref<2x2x128x128xbf16, #tpu.memory_space<vmem>>, vector<1x1x128x128xbf16>
    %300 = vector.shape_cast %299 : vector<1x1x128x128xbf16> to vector<128x128xbf16>
    %cst_96 = arith.constant dense<0.000000e+00> : vector<16x128xf32>
    %301 = tpu.matmul %298, %300, %cst_96 {dimension_numbers = #tpu.dot_dimension_numbers<[1], [0], [0], [1], [0, 0, 1, 1], [], []>} : vector<16x128xbf16>, vector<128x128xbf16>, vector<16x128xf32> -> vector<16x128xf32>
    %302 = vector.broadcast %180 : vector<1x128xf32> to vector<16x128xf32>
    %303 = arith.addf %301, %302 : vector<16x128xf32>
    %304 = arith.addf %261, %303 : vector<16x128xf32>
    %305 = vector.extract_strided_slice %0 {offsets = [2, 0], sizes = [1, 128], strides = [1, 1]} : vector<8x128xf32> to vector<1x128xf32>
    %306 = vector.extract_strided_slice %0 {offsets = [3, 0], sizes = [1, 128], strides = [1, 1]} : vector<8x128xf32> to vector<1x128xf32>
    %cst_97 = arith.constant dense<0.000000e+00> : vector<16xf32>
    %307 = vector.multi_reduction <add>, %304, %cst_97 [1] : vector<16x128xf32> to vector<16xf32>
    %308 = vector.shape_cast %307 : vector<16xf32> to vector<16x1xf32>
    %cst_98 = arith.constant 3.125000e-02 : f32
    %309 = vector.broadcast %cst_98 : f32 to vector<16x1xf32>
    %310 = arith.mulf %308, %309 : vector<16x1xf32>
    %311 = arith.mulf %304, %304 : vector<16x128xf32>
    %cst_99 = arith.constant dense<0.000000e+00> : vector<16xf32>
    %312 = vector.multi_reduction <add>, %311, %cst_99 [1] : vector<16x128xf32> to vector<16xf32>
    %313 = vector.shape_cast %312 : vector<16xf32> to vector<16x1xf32>
    %cst_100 = arith.constant 3.125000e-02 : f32
    %314 = vector.broadcast %cst_100 : f32 to vector<16x1xf32>
    %315 = arith.mulf %313, %314 : vector<16x1xf32>
    %316 = arith.mulf %310, %310 : vector<16x1xf32>
    %317 = arith.subf %315, %316 : vector<16x1xf32>
    %318 = vector.broadcast %310 : vector<16x1xf32> to vector<16x128xf32>
    %319 = arith.subf %304, %318 : vector<16x128xf32>
    %cst_101 = arith.constant 9.99999974E-6 : f32
    %320 = vector.broadcast %cst_101 : f32 to vector<16x1xf32>
    %321 = arith.addf %317, %320 : vector<16x1xf32>
    %322 = math.rsqrt %321 : vector<16x1xf32>
    %323 = vector.broadcast %322 : vector<16x1xf32> to vector<16x128xf32>
    %324 = arith.mulf %319, %323 : vector<16x128xf32>
    %325 = vector.broadcast %305 : vector<1x128xf32> to vector<16x128xf32>
    %326 = arith.mulf %324, %325 : vector<16x128xf32>
    %327 = vector.broadcast %306 : vector<1x128xf32> to vector<16x128xf32>
    %328 = arith.addf %326, %327 : vector<16x128xf32>
    %329 = arith.truncf %328 : vector<16x128xf32> to vector<16x128xbf16>
    %c0_102 = arith.constant 0 : index
    %c0_103 = arith.constant 0 : index
    %330 = vector.load %arg9[%c0_102, %c0_103] : memref<128x128xbf16, #tpu.memory_space<vmem>>, vector<128x128xbf16>
    %cst_104 = arith.constant dense<0.000000e+00> : vector<16x128xf32>
    %331 = tpu.matmul %329, %330, %cst_104 {dimension_numbers = #tpu.dot_dimension_numbers<[1], [0], [0], [1], [0, 0, 1, 1], [], []>} : vector<16x128xbf16>, vector<128x128xbf16>, vector<16x128xf32> -> vector<16x128xf32>
    %c0_105 = arith.constant 0 : index
    %c0_106 = arith.constant 0 : index
    %332 = vector.load %arg10[%c0_105, %c0_106] : memref<16x128xf32, #tpu.memory_space<vmem>>, vector<16x128xf32>
    tpu.vector_store %arg10[%c0_105, %c0_106], %331 {strides = array<i32>} : memref<16x128xf32, #tpu.memory_space<vmem>>, vector<16x128xf32>,
    return
  }
}

</mosaic_0001>

<llo_original>
// kernel: encode_image.1
$region0: #{encode_image.1}
  #allocation0 [shape = 'u32[]', space=smem, size = 0x4, offset = 0x4, fixed_abs, tag = 'smem constant byte address 0x4 - core index']
  #allocation1 [shape = 'u32[144,128]{1,0:T(1,128)}', space=vmem, size = 0x12000, scoped, tag = 'internal scratch']
  %s0 = inlined_call_operand.vmem [shape: f32[16,192], index: 0, kind: input, shape index: {}]
  %s1 = inlined_call_operand.vmem [shape: bf16[192,128], index: 1, kind: input, shape index: {}]
  %s2 = inlined_call_operand.hbm [shape: bf16[16,128], index: 2, kind: input, shape index: {}]
  %s3 = inlined_call_operand.vmem [shape: f32[8,128], index: 3, kind: input, shape index: {}]
  %s4 = inlined_call_operand.hbm [shape: f32[16,16], index: 4, kind: input, shape index: {}]
  %s5 = inlined_call_operand.hbm [shape: f32[2,16,128], index: 5, kind: input, shape index: {}]
  %s6 = inlined_call_operand.vmem [shape: bf16[2,128,384], index: 6, kind: input, shape index: {}]
  %s7 = inlined_call_operand.vmem [shape: bf16[2,128,128], index: 7, kind: input, shape index: {}]
  %s8 = inlined_call_operand.vmem [shape: bf16[2,2,128,128], index: 8, kind: input, shape index: {}]
  %s9 = inlined_call_operand.vmem [shape: bf16[128,128], index: 9, kind: input, shape index: {}]
  %s10 = inlined_call_operand.vmem [shape: f32[16,128], index: 10, kind: output, shape index: {}]
  %s11 = sld [smem:[#allocation0]]
  $region62: #{encode_image.1} parent=0
    _
  %s13 = ssub.s32 1, %s11
  %s14 = scalar_select 0, %s13, %s11
  $region1: #{encode_image.1} parent=0
    #allocation2 [shape = 'u8[4096]{0}', space=vmem, size = 0x1000, scoped, tag = 'input window, operand 2, single buffered']
    #allocation3 [shape = 's32[1]{0}', space=sflag, size = 0x4, scoped, tag = 'scoped memory for encode_image.1']
    #allocation4 [shape = 'u8[8192]{0}', space=vmem, size = 0x2000, scoped, tag = 'input window, operand 4, single buffered']
    #allocation5 [shape = 's32[1]{0}', space=sflag, size = 0x4, scoped, tag = 'scoped memory for encode_image.1']
    #allocation6 [shape = 'u8[16384]{0}', space=vmem, size = 0x4000, scoped, tag = 'input window, operand 5, single buffered']
    %15 = vsyncpa [#allocation3], 0
    %16 = vsyncpa [#allocation5], 0
    // Predicated region
    $region2: #{encode_image.1} parent=1 // pred_check
      _
    $region3: #{encode_image.1} parent=1 // pred_check_branch
      %18 = sbr.rel (0) target = $region5
    $region4: #{encode_image.1} parent=1 // pred_region
      _
    $region5: #{encode_image.1} parent=1 // pred_fallthru
      _
    // Predicated region
    $region6: #{encode_image.1} parent=1 // pred_check
      _
    $region7: #{encode_image.1} parent=1 // pred_check_branch
      %20 = sbr.rel (0) target = $region9
    $region8: #{encode_image.1} parent=1 // pred_region
      _
    $region9: #{encode_image.1} parent=1 // pred_fallthru
      _
    // Predicated region
    $region10: #{encode_image.1} parent=1 // pred_check
      _
    $region11: #{encode_image.1} parent=1 // pred_check_branch
      %22 = sbr.rel (0) target = $region13
    $region12: #{encode_image.1} parent=1 // pred_region
      %s24 = ssub.s32 128, 128
      %25 = vsyncadd [#allocation3], %s24
      %s26 = sshll.u32 [#allocation2], 4
      %s27 = int_to_ptr.vmem [resolvable:$true] %s26
      %32 = dma.hbm_to_vmem [thread:$0]  %s2, 128, %s27, [#allocation3], 64, 64, 4
    $region13: #{encode_image.1} parent=1 // pred_fallthru
      _
    // Predicated region
    $region14: #{encode_image.1} parent=1 // pred_check
      _
    $region15: #{encode_image.1} parent=1 // pred_check_branch
      %34 = sbr.rel (0) target = $region17
    $region16: #{encode_image.1} parent=1 // pred_region
      _
    $region17: #{encode_image.1} parent=1 // pred_fallthru
      _
    // Predicated region
    $region18: #{encode_image.1} parent=1 // pred_check
      _
    $region19: #{encode_image.1} parent=1 // pred_check_branch
      %36 = sbr.rel (0) target = $region21
    $region20: #{encode_image.1} parent=1 // pred_region
      %s38 = ssub.s32 256, 256
      %39 = vsyncadd [#allocation5], %s38
      %s40 = sshll.u32 [#allocation4], 4
      %s41 = int_to_ptr.vmem [resolvable:$true] %s40
      %46 = dma.hbm_to_vmem [thread:$0]  %s4, 256, %s41, [#allocation5], 128, 128, 8
    $region21: #{encode_image.1} parent=1 // pred_fallthru
      _
    // Predicated region
    $region22: #{encode_image.1} parent=1 // pred_check
      _
    $region23: #{encode_image.1} parent=1 // pred_check_branch
      %48 = sbr.rel (0) target = $region25
    $region24: #{encode_image.1} parent=1 // pred_region
      %s50 = ssub.s32 512, 512
      %51 = vsyncadd [#allocation5], %s50
      %s52 = sshll.u32 [#allocation6], 4
      %s53 = int_to_ptr.vmem [resolvable:$true] %s52
      %58 = dma.hbm_to_vmem [thread:$0]  %s5, 512, %s53, [#allocation5], 128, 128, 8
    $region25: #{encode_image.1} parent=1 // pred_fallthru
      _
    // Predicated region
    $region26: #{encode_image.1} parent=1 // pred_check
      _
    $region27: #{encode_image.1} parent=1 // pred_check_branch
      %60 = sbr.rel (0) target = $region29
    $region28: #{encode_image.1} parent=1 // pred_region
      _
    $region29: #{encode_image.1} parent=1 // pred_fallthru
      _
    // Predicated region
    $region30: #{encode_image.1} parent=1 // pred_check
      _
    $region31: #{encode_image.1} parent=1 // pred_check_branch
      %62 = sbr.rel (0) target = $region33
    $region32: #{encode_image.1} parent=1 // pred_region
      _
    $region33: #{encode_image.1} parent=1 // pred_fallthru
      _
    // Predicated region
    $region34: #{encode_image.1} parent=1 // pred_check
      _
    $region35: #{encode_image.1} parent=1 // pred_check_branch
      %64 = sbr.rel (0) target = $region37
    $region36: #{encode_image.1} parent=1 // pred_region
      _
    $region37: #{encode_image.1} parent=1 // pred_fallthru
      _
    // Predicated region
    $region38: #{encode_image.1} parent=1 // pred_check
      _
    $region39: #{encode_image.1} parent=1 // pred_check_branch
      %66 = sbr.rel (0) target = $region41
    $region40: #{encode_image.1} parent=1 // pred_region
      _
    $region41: #{encode_image.1} parent=1 // pred_fallthru
      _
    // Predicated region
    $region42: #{encode_image.1} parent=1 // pred_check
      _
    $region43: #{encode_image.1} parent=1 // pred_check_branch
      %68 = sbr.rel (0) target = $region45
    $region44: #{encode_image.1} parent=1 // pred_region
      %69 = dma.done [#allocation3], 128
    $region45: #{encode_image.1} parent=1 // pred_fallthru
      _
    // Predicated region
    $region46: #{encode_image.1} parent=1 // pred_check
      _
    $region47: #{encode_image.1} parent=1 // pred_check_branch
      %71 = sbr.rel (0) target = $region49
    $region48: #{encode_image.1} parent=1 // pred_region
      %72 = dma.done [#allocation5], 256
    $region49: #{encode_image.1} parent=1 // pred_fallthru
      _
    // Predicated region
    $region50: #{encode_image.1} parent=1 // pred_check
      _
    $region51: #{encode_image.1} parent=1 // pred_check_branch
      %74 = sbr.rel (0) target = $region53
    $region52: #{encode_image.1} parent=1 // pred_region
      %75 = dma.done [#allocation5], 512
    $region53: #{encode_image.1} parent=1 // pred_fallthru
      _
    %v77 = vld [vmem:[%s3] sm:$0xff]
    %v78 = vld [vmem:[#allocation4] sm:$0xff]
    %v79 = vld [vmem:[#allocation4 + $0x8] sm:$0xff]
    %v80 = vld [vmem:[%s0] sm:$0xff]
    %v81 = vld [vmem:[%s0 + $0x8] sm:$0xff]
    %v82 = vld [vmem:[%s0 + $0x10] sm:$0xff]
    %v83 = vld [vmem:[%s0 + $0x18] sm:$0xff]
    %v84 = vpack.c.bf16 %v82, %v80
    %v85 = vpack.c.bf16 %v83, %v81
    %v86 = vld [vmem:[%s1] sm:$0xf]
    %v87 = vld [vmem:[%s1 + $0x4] sm:$0xf]
    %v88 = vld [vmem:[%s1 + $0x8] sm:$0xf]
    %v89 = vld [vmem:[%s1 + $0xc] sm:$0xf]
    %v90 = vld [vmem:[%s1 + $0x10] sm:$0xf]
    %v91 = vld [vmem:[%s1 + $0x14] sm:$0xf]
    %v92 = vld [vmem:[%s1 + $0x18] sm:$0xf]
    %v93 = vld [vmem:[%s1 + $0x1c] sm:$0xf]
    %v94 = vld [vmem:[%s1 + $0x20] sm:$0xf]
    %v95 = vld [vmem:[%s1 + $0x24] sm:$0xf]
    %v96 = vld [vmem:[%s1 + $0x28] sm:$0xf]
    %v97 = vld [vmem:[%s1 + $0x2c] sm:$0xf]
    %v98 = vld [vmem:[%s1 + $0x30] sm:$0xf]
    %v99 = vld [vmem:[%s1 + $0x34] sm:$0xf]
    %v100 = vld [vmem:[%s1 + $0x38] sm:$0xf]
    %v101 = vld [vmem:[%s1 + $0x3c] sm:$0xf]
    %v102 = vld [vmem:[%s1 + $0x40] sm:$0xf]
    %v103 = vld [vmem:[%s1 + $0x44] sm:$0xf]
    %v104 = vld [vmem:[%s1 + $0x48] sm:$0xf]
    %v105 = vld [vmem:[%s1 + $0x4c] sm:$0xf]
    %v106 = vld [vmem:[%s1 + $0x50] sm:$0xf]
    %v107 = vld [vmem:[%s1 + $0x54] sm:$0xf]
    %v108 = vld [vmem:[%s1 + $0x58] sm:$0xf]
    %v109 = vld [vmem:[%s1 + $0x5c] sm:$0xf]
    %v110 = vld [vmem:[#allocation2] sm:$0xf]
    %v111 = vld [vmem:[#allocation2 + $0x4] sm:$0xf]
    %v112 = vunpack.c.l.bf16 %v110
    %v113 = vunpack.c.l.bf16 %v111
    %v138 = vunpack.c.l.b16 %v86
    %v139 = vunpack.c.l.b16 %v87
    %v140 = vunpack.c.l.b16 %v88
    %v141 = vunpack.c.l.b16 %v89
    %v142 = vunpack.c.l.b16 %v90
    %v143 = vunpack.c.l.b16 %v91
    %v144 = vunpack.c.l.b16 %v92
    %v145 = vunpack.c.l.b16 %v93
    %v146 = vunpack.c.l.b16 %v94
    %v147 = vunpack.c.l.b16 %v95
    %v148 = vunpack.c.l.b16 %v96
    %v149 = vunpack.c.l.b16 %v97
    %v150 = vunpack.c.l.b16 %v98
    %v151 = vunpack.c.l.b16 %v99
    %v152 = vunpack.c.l.b16 %v100
    %v153 = vunpack.c.l.b16 %v101
    %v154 = vunpack.c.l.b16 %v102
    %v155 = vunpack.c.l.b16 %v103
    %v156 = vunpack.c.l.b16 %v104
    %v157 = vunpack.c.l.b16 %v105
    %v158 = vunpack.c.l.b16 %v106
    %v159 = vunpack.c.l.b16 %v107
    %v160 = vunpack.c.l.b16 %v108
    %v161 = vunpack.c.l.b16 %v109
    %v162 = vpack.c.b16 %v139, %v138
    %v163 = vpack.c.b16 %v141, %v140
    %v164 = vpack.c.b16 %v143, %v142
    %v165 = vpack.c.b16 %v145, %v144
    %v166 = vpack.c.b16 %v147, %v146
    %v167 = vpack.c.b16 %v149, %v148
    %v168 = vpack.c.b16 %v151, %v150
    %v169 = vpack.c.b16 %v153, %v152
    %v170 = vpack.c.b16 %v155, %v154
    %v171 = vpack.c.b16 %v157, %v156
    %v172 = vpack.c.b16 %v159, %v158
    %v173 = vpack.c.b16 %v161, %v160
    %vm186 = vcmask 523264
    %v188 = vsel %vm186, %v85, 0
    %190 = vmatprep.subr.bf16.mxu0 0
    %191 = vmatpush1.bf16.msra.mxu0 %v162
    %192 = vmatprep.subr.bf16.mxu0 0
    %193 = vmatpush1.bf16.msra.mxu0 %v163
    %194 = vmatprep.subr.bf16.mxu0 0
    %195 = vmatpush1.bf16.msra.mxu0 %v164
    %196 = vmatprep.subr.bf16.mxu0 0
    %197 = vmatpush1.bf16.msra.mxu0 %v165
    %198 = vmatprep.subr.bf16.mxu0 0
    %199 = vmatpush1.bf16.msra.mxu0 %v166
    %200 = vmatprep.subr.bf16.mxu0 0
    %201 = vmatpush1.bf16.msra.mxu0 %v167
    %202 = vmatprep.subr.bf16.mxu0 0
    %203 = vmatpush1.bf16.msra.mxu0 %v168
    %204 = vmatprep.subr.bf16.mxu0 0
    %205 = vmatpush1.bf16.msra.mxu0 %v169
    %206 = vmatprep.subr.bf16.mxu0 0
    %207 = vmatpush1.bf16.msra.mxu0 %v170
    %208 = vmatprep.subr.bf16.mxu0 0
    %209 = vmatpush1.bf16.msra.mxu0 %v171
    %210 = vmatprep.subr.bf16.mxu0 0
    %211 = vmatpush1.bf16.msra.mxu0 %v172
    %212 = vmatprep.subr.bf16.mxu0 0
    %213 = vmatpush1.bf16.msra.mxu0 %v173
    %214 = vmatprep.subr.bf16.mxu0 0
    %215 = vmatpush1.bf16.msra.mxu0 0
    %216 = vmatprep.subr.bf16.mxu0 0
    %217 = vmatpush1.bf16.msra.mxu0 0
    %218 = vmatprep.subr.bf16.mxu0 0
    %219 = vmatpush1.bf16.msra.mxu0 0
    %220 = vmatprep.subr.bf16.mxu0 0
    %221 = vmatpush1.bf16.msra.mxu0 0
    %222 = vmatprep.mubr.bf16.mxu0 %v188
    %223 = vmatmul.mubr.bf16.gmra.mrb[0].mxu0 %v84
    %v224 = vpop.f32.mrb[0].mxu0
    %v225 = vadd.f32 %v112, %v224
    %v226 = vpop.f32.mrb[0].mxu0
    %v227 = vpop.f32.mrb[0].mxu0
    %v228 = vadd.f32 %v113, %v227
    %v229 = vpop.f32.mrb[0].mxu0
    %230 = vdwg.mxu0
    %231 = vadd.xlane.f32.xlu0 %v225
    %v232 = vpop.xlane.xlu0 %231
    %233 = vadd.xlane.f32.xlu0 %v228
    %v234 = vpop.xlane.xlu0 %233
    %v235 = vmul.f32 %v232, 0.03125
    %v236 = vmul.f32 %v234, 0.03125
    %v237 = vmul.f32 %v225, %v225
    %v238 = vmul.f32 %v228, %v228
    %239 = vadd.xlane.f32.xlu0 %v237
    %v240 = vpop.xlane.xlu0 %239
    %241 = vadd.xlane.f32.xlu0 %v238
    %v242 = vpop.xlane.xlu0 %241
    %v243 = vmul.f32 %v240, 0.03125
    %v244 = vmul.f32 %v242, 0.03125
    %v245 = vmul.f32 %v235, %v235
    %v246 = vmul.f32 %v236, %v236
    %v247 = vsub.f32 %v243, %v245
    %v248 = vsub.f32 %v244, %v246
    %v249 = vsub.f32 %v225, %v235
    %v250 = vsub.f32 %v228, %v236
    %v251 = vadd.f32 %v247, 1e-05
    %v252 = vadd.f32 %v248, 1e-05
    %v253 = vrsqrt.pop %v251
    %v254 = vrsqrt.pop %v252
    %v255 = vmul.f32 %v249, %v253
    %v256 = vmul.f32 %v250, %v254
    %v257 = vlaneseq
    %v258 = vshrl.u32 %v257, 7
    %v259 = vsub.s32 0, %v258
    %v260 = vrot.slane %v77, %v259
    %v261 = vmul.f32 %v255, %v260
    %v262 = vmul.f32 %v256, %v260
    %v263 = vlaneseq
    %v264 = vshrl.u32 %v263, 7
    %v265 = vsub.s32 1, %v264
    %v266 = vrot.slane %v77, %v265
    %v267 = vadd.f32 %v261, %v266
    %v268 = vadd.f32 %v262, %v266
    %v269 = vld [vmem:[#allocation6] sm:$0xff]
    %v270 = vld [vmem:[#allocation6 + $0x8] sm:$0xff]
    %271 = vadd.xlane.f32.xlu0 %v267
    %v272 = vpop.xlane.xlu0 %271
    %273 = vadd.xlane.f32.xlu0 %v268
    %v274 = vpop.xlane.xlu0 %273
    %v275 = vmul.f32 %v272, 0.03125
    %v276 = vmul.f32 %v274, 0.03125
    %v277 = vmul.f32 %v267, %v267
    %v278 = vmul.f32 %v268, %v268
    %279 = vadd.xlane.f32.xlu0 %v277
    %v280 = vpop.xlane.xlu0 %279
    %281 = vadd.xlane.f32.xlu0 %v278
    %v282 = vpop.xlane.xlu0 %281
    %v283 = vmul.f32 %v280, 0.03125
    %v284 = vmul.f32 %v282, 0.03125
    %v285 = vmul.f32 %v275, %v275
    %v286 = vmul.f32 %v276, %v276
    %v287 = vsub.f32 %v283, %v285
    %v288 = vsub.f32 %v284, %v286
    %v289 = vsub.f32 %v267, %v275
    %v290 = vsub.f32 %v268, %v276
    %v291 = vadd.f32 %v287, 1e-05
    %v292 = vadd.f32 %v288, 1e-05
    %v293 = vrsqrt.pop %v291
    %v294 = vrsqrt.pop %v292
    %v295 = vmul.f32 %v289, %v293
    %v296 = vmul.f32 %v290, %v294
    %v297 = vlaneseq
    %v298 = vshrl.u32 %v297, 7
    %v299 = vsub.s32 0, %v298
    %v300 = vrot.slane %v269, %v299
    %v301 = vmul.f32 %v295, %v300
    %v302 = vmul.f32 %v296, %v300
    %v303 = vlaneseq
    %v304 = vshrl.u32 %v303, 7
    %v305 = vsub.s32 1, %v304
    %v306 = vrot.slane %v269, %v305
    %v307 = vadd.f32 %v301, %v306
    %v308 = vadd.f32 %v302, %v306
    %v309 = vpack.c.bf16 %v308, %v307
    %v310 = vld [vmem:[%s6] sm:$0xff]
    %v311 = vld [vmem:[%s6 + $0x8] sm:$0xf]
    %v312 = vld [vmem:[%s6 + $0xc] sm:$0xff]
    %v313 = vld [vmem:[%s6 + $0x14] sm:$0xf]
    %v314 = vld [vmem:[%s6 + $0x18] sm:$0xff]
    %v315 = vld [vmem:[%s6 + $0x20] sm:$0xf]
    %v316 = vld [vmem:[%s6 + $0x24] sm:$0xff]
    %v317 = vld [vmem:[%s6 + $0x2c] sm:$0xf]
    %v318 = vld [vmem:[%s6 + $0x30] sm:$0xff]
    %v319 = vld [vmem:[%s6 + $0x38] sm:$0xf]
    %v320 = vld [vmem:[%s6 + $0x3c] sm:$0xff]
    %v321 = vld [vmem:[%s6 + $0x44] sm:$0xf]
    %v322 = vld [vmem:[%s6 + $0x48] sm:$0xff]
    %v323 = vld [vmem:[%s6 + $0x50] sm:$0xf]
    %v324 = vld [vmem:[%s6 + $0x54] sm:$0xff]
    %v325 = vld [vmem:[%s6 + $0x5c] sm:$0xf]
    %v326 = vld [vmem:[%s6 + $0x60] sm:$0xff]
    %v327 = vld [vmem:[%s6 + $0x68] sm:$0xf]
    %v328 = vld [vmem:[%s6 + $0x6c] sm:$0xff]
    %v329 = vld [vmem:[%s6 + $0x74] sm:$0xf]
    %v330 = vld [vmem:[%s6 + $0x78] sm:$0xff]
    %v331 = vld [vmem:[%s6 + $0x80] sm:$0xf]
    %v332 = vld [vmem:[%s6 + $0x84] sm:$0xff]
    %v333 = vld [vmem:[%s6 + $0x8c] sm:$0xf]
    %v334 = vld [vmem:[%s6 + $0x90] sm:$0xff]
    %v335 = vld [vmem:[%s6 + $0x98] sm:$0xf]
    %v336 = vld [vmem:[%s6 + $0x9c] sm:$0xff]
    %v337 = vld [vmem:[%s6 + $0xa4] sm:$0xf]
    %v338 = vld [vmem:[%s6 + $0xa8] sm:$0xff]
    %v339 = vld [vmem:[%s6 + $0xb0] sm:$0xf]
    %v340 = vld [vmem:[%s6 + $0xb4] sm:$0xff]
    %v341 = vld [vmem:[%s6 + $0xbc] sm:$0xf]
    %v374 = vunpack.c.l.b16 %v310
    %v375 = vunpack.c.h.b16 %v310
    %v376 = vunpack.c.l.b16 %v311
    %v377 = vunpack.c.l.b16 %v312
    %v378 = vunpack.c.h.b16 %v312
    %v379 = vunpack.c.l.b16 %v313
    %v380 = vunpack.c.l.b16 %v314
    %v381 = vunpack.c.h.b16 %v314
    %v382 = vunpack.c.l.b16 %v315
    %v383 = vunpack.c.l.b16 %v316
    %v384 = vunpack.c.h.b16 %v316
    %v385 = vunpack.c.l.b16 %v317
    %v386 = vunpack.c.l.b16 %v318
    %v387 = vunpack.c.h.b16 %v318
    %v388 = vunpack.c.l.b16 %v319
    %v389 = vunpack.c.l.b16 %v320
    %v390 = vunpack.c.h.b16 %v320
    %v391 = vunpack.c.l.b16 %v321
    %v392 = vunpack.c.l.b16 %v322
    %v393 = vunpack.c.h.b16 %v322
    %v394 = vunpack.c.l.b16 %v323
    %v395 = vunpack.c.l.b16 %v324
    %v396 = vunpack.c.h.b16 %v324
    %v397 = vunpack.c.l.b16 %v325
    %v398 = vunpack.c.l.b16 %v326
    %v399 = vunpack.c.h.b16 %v326
    %v400 = vunpack.c.l.b16 %v327
    %v401 = vunpack.c.l.b16 %v328
    %v402 = vunpack.c.h.b16 %v328
    %v403 = vunpack.c.l.b16 %v329
    %v404 = vunpack.c.l.b16 %v330
    %v405 = vunpack.c.h.b16 %v330
    %v406 = vunpack.c.l.b16 %v331
    %v407 = vunpack.c.l.b16 %v332
    %v408 = vunpack.c.h.b16 %v332
    %v409 = vunpack.c.l.b16 %v333
    %v410 = vunpack.c.l.b16 %v334
    %v411 = vunpack.c.h.b16 %v334
    %v412 = vunpack.c.l.b16 %v335
    %v413 = vunpack.c.l.b16 %v336
    %v414 = vunpack.c.h.b16 %v336
    %v415 = vunpack.c.l.b16 %v337
    %v416 = vunpack.c.l.b16 %v338
    %v417 = vunpack.c.h.b16 %v338
    %v418 = vunpack.c.l.b16 %v339
    %v419 = vunpack.c.l.b16 %v340
    %v420 = vunpack.c.h.b16 %v340
    %v421 = vunpack.c.l.b16 %v341
    %v422 = vpack.c.b16 %v377, %v374
    %v423 = vpack.c.b16 %v378, %v375
    %v424 = vpack.c.b16 %v379, %v376
    %v425 = vpack.c.b16 %v383, %v380
    %v426 = vpack.c.b16 %v384, %v381
    %v427 = vpack.c.b16 %v385, %v382
    %v428 = vpack.c.b16 %v389, %v386
    %v429 = vpack.c.b16 %v390, %v387
    %v430 = vpack.c.b16 %v391, %v388
    %v431 = vpack.c.b16 %v395, %v392
    %v432 = vpack.c.b16 %v396, %v393
    %v433 = vpack.c.b16 %v397, %v394
    %v434 = vpack.c.b16 %v401, %v398
    %v435 = vpack.c.b16 %v402, %v399
    %v436 = vpack.c.b16 %v403, %v400
    %v437 = vpack.c.b16 %v407, %v404
    %v438 = vpack.c.b16 %v408, %v405
    %v439 = vpack.c.b16 %v409, %v406
    %v440 = vpack.c.b16 %v413, %v410
    %v441 = vpack.c.b16 %v414, %v411
    %v442 = vpack.c.b16 %v415, %v412
    %v443 = vpack.c.b16 %v419, %v416
    %v444 = vpack.c.b16 %v420, %v417
    %v445 = vpack.c.b16 %v421, %v418
    %470 = vmatprep.subr.bf16.mxu0 %v423
    %471 = vmatpush1.bf16.msra.mxu0 %v422
    %472 = vmatprep.subr.bf16.mxu0 %v426
    %473 = vmatpush1.bf16.msra.mxu0 %v425
    %474 = vmatprep.subr.bf16.mxu0 %v429
    %475 = vmatpush1.bf16.msra.mxu0 %v428
    %476 = vmatprep.subr.bf16.mxu0 %v432
    %477 = vmatpush1.bf16.msra.mxu0 %v431
    %478 = vmatprep.subr.bf16.mxu0 %v435
    %479 = vmatpush1.bf16.msra.mxu0 %v434
    %480 = vmatprep.subr.bf16.mxu0 %v438
    %481 = vmatpush1.bf16.msra.mxu0 %v437
    %482 = vmatprep.subr.bf16.mxu0 %v441
    %483 = vmatpush1.bf16.msra.mxu0 %v440
    %484 = vmatprep.subr.bf16.mxu0 %v444
    %485 = vmatpush1.bf16.msra.mxu0 %v443
    %486 = vmatprep.subr.bf16.mxu0 0
    %487 = vmatpush1.bf16.msra.mxu0 0
    %488 = vmatprep.subr.bf16.mxu0 0
    %489 = vmatpush1.bf16.msra.mxu0 0
    %490 = vmatprep.subr.bf16.mxu0 0
    %491 = vmatpush1.bf16.msra.mxu0 0
    %492 = vmatprep.subr.bf16.mxu0 0
    %493 = vmatpush1.bf16.msra.mxu0 0
    %494 = vmatprep.subr.bf16.mxu0 0
    %495 = vmatpush1.bf16.msra.mxu0 0
    %496 = vmatprep.subr.bf16.mxu0 0
    %497 = vmatpush1.bf16.msra.mxu0 0
    %498 = vmatprep.subr.bf16.mxu0 0
    %499 = vmatpush1.bf16.msra.mxu0 0
    %500 = vmatprep.subr.bf16.mxu0 0
    %501 = vmatpush1.bf16.msra.mxu0 0
    %502 = vmatprep.mubr.bf16.mxu0 0
    %503 = vmatmul.mubr.bf16.gmra.mrb[0].mxu0 %v309
    %v504 = vpop.f32.mrb[0].mxu0
    %v505 = vadd.f32 0.0, %v504
    %v506 = vpop.f32.mrb[0].mxu0
    %v507 = vadd.f32 0.0, %v506
    %v508 = vpop.f32.mrb[0].mxu0
    %v509 = vadd.f32 0.0, %v508
    %v510 = vpop.f32.mrb[0].mxu0
    %v511 = vadd.f32 0.0, %v510
    %512 = vdwg.mxu0
    %513 = vmatprep.subr.bf16.mxu0 0
    %514 = vmatpush1.bf16.msra.mxu0 %v424
    %515 = vmatprep.subr.bf16.mxu0 0
    %516 = vmatpush1.bf16.msra.mxu0 %v427
    %517 = vmatprep.subr.bf16.mxu0 0
    %518 = vmatpush1.bf16.msra.mxu0 %v430
    %519 = vmatprep.subr.bf16.mxu0 0
    %520 = vmatpush1.bf16.msra.mxu0 %v433
    %521 = vmatprep.subr.bf16.mxu0 0
    %522 = vmatpush1.bf16.msra.mxu0 %v436
    %523 = vmatprep.subr.bf16.mxu0 0
    %524 = vmatpush1.bf16.msra.mxu0 %v439
    %525 = vmatprep.subr.bf16.mxu0 0
    %526 = vmatpush1.bf16.msra.mxu0 %v442
    %527 = vmatprep.subr.bf16.mxu0 0
    %528 = vmatpush1.bf16.msra.mxu0 %v445
    %529 = vmatprep.subr.bf16.mxu0 0
    %530 = vmatpush1.bf16.msra.mxu0 0
    %531 = vmatprep.subr.bf16.mxu0 0
    %532 = vmatpush1.bf16.msra.mxu0 0
    %533 = vmatprep.subr.bf16.mxu0 0
    %534 = vmatpush1.bf16.msra.mxu0 0
    %535 = vmatprep.subr.bf16.mxu0 0
    %536 = vmatpush1.bf16.msra.mxu0 0
    %537 = vmatprep.subr.bf16.mxu0 0
    %538 = vmatpush1.bf16.msra.mxu0 0
    %539 = vmatprep.subr.bf16.mxu0 0
    %540 = vmatpush1.bf16.msra.mxu0 0
    %541 = vmatprep.subr.bf16.mxu0 0
    %542 = vmatpush1.bf16.msra.mxu0 0
    %543 = vmatprep.subr.bf16.mxu0 0
    %544 = vmatpush1.bf16.msra.mxu0 0
    %545 = vmatprep.mubr.bf16.mxu0 0
    %546 = vmatmul.mubr.bf16.gmra.mrb[0].mxu0 %v309
    %v547 = vpop.f32.mrb[0].mxu0
    %v548 = vadd.f32 0.0, %v547
    %v549 = vpop.f32.mrb[0].mxu0
    %v550 = vpop.f32.mrb[0].mxu0
    %v551 = vadd.f32 0.0, %v550
    %v552 = vpop.f32.mrb[0].mxu0
    %553 = vdwg.mxu0
    %v554 = vlaneseq
    %v555 = vshrl.u32 %v554, 7
    %v556 = vsub.s32 4, %v555
    %v557 = vrot.slane %v269, %v556
    %v558 = vadd.f32 %v505, %v557
    %v559 = vadd.f32 %v509, %v557
    %v560 = vlaneseq
    %v561 = vshrl.u32 %v560, 7
    %v562 = vsub.s32 5, %v561
    %v563 = vrot.slane %v269, %v562
    %v564 = vadd.f32 %v507, %v563
    %v565 = vadd.f32 %v511, %v563
    %v566 = vlaneseq
    %v567 = vshrl.u32 %v566, 7
    %v568 = vsub.s32 6, %v567
    %v569 = vrot.slane %v269, %v568
    %v570 = vadd.f32 %v548, %v569
    %v571 = vadd.f32 %v551, %v569
    %v572 = vlaneseq
    %v573 = vshrl.u32 %v572, 7
    %v574 = vsub.s32 4, %v573
    %v575 = vrot.slane %v77, %v574
    %v576 = vmul.f32 %v558, %v575
    %v577 = vmul.f32 %v559, %v575
    %578 = vmatprep.subr.mxu0 0.0
    %579 = vmatpush1.xpose.msra.mxu0 %v564
    %580 = vmatprep.subr.mxu0 0.0
    %581 = vmatpush1.xpose.msra.mxu0 %v565
    %582 = vmatprep.subr.mxu0 0.0
    %583 = vmatpush1.xpose.msra.mxu0 0.0
    %584 = vmatprep.subr.mxu0 0.0
    %585 = vmatpush1.xpose.msra.mxu0 0.0
    %586 = vmatprep.subr.mxu0 0.0
    %587 = vmatpush1.xpose.msra.mxu0 0.0
    %588 = vmatprep.subr.mxu0 0.0
    %589 = vmatpush1.xpose.msra.mxu0 0.0
    %590 = vmatprep.subr.mxu0 0.0
    %591 = vmatpush1.xpose.msra.mxu0 0.0
    %592 = vmatprep.subr.mxu0 0.0
    %593 = vmatpush1.xpose.msra.mxu0 0.0
    %594 = vmatprep.subr.mxu0 0.0
    %595 = vmatpush1.xpose.msra.mxu0 0.0
    %596 = vmatprep.subr.mxu0 0.0
    %597 = vmatpush1.xpose.msra.mxu0 0.0
    %598 = vmatprep.subr.mxu0 0.0
    %599 = vmatpush1.xpose.msra.mxu0 0.0
    %600 = vmatprep.subr.mxu0 0.0
    %601 = vmatpush1.xpose.msra.mxu0 0.0
    %602 = vmatprep.subr.mxu0 0.0
    %603 = vmatpush1.xpose.msra.mxu0 0.0
    %604 = vmatprep.subr.mxu0 0.0
    %605 = vmatpush1.xpose.msra.mxu0 0.0
    %606 = vmatprep.subr.mxu0 0.0
    %607 = vmatpush1.xpose.msra.mxu0 0.0
    %608 = vmatprep.subr.mxu0 0.0
    %609 = vmatpush1.xpose.msra.mxu0 0.0
    %610 = vmatprep.subr.mxu0 0.0
    %611 = vmatpush1.xpose.msra.mxu0 0.0
    %612 = vmatprep.subr.mxu0 0.0
    %613 = vmatpush1.xpose.msra.mxu0 0.0
    %614 = vmatprep.subr.mxu0 0.0
    %615 = vmatpush1.xpose.msra.mxu0 0.0
    %616 = vmatprep.subr.mxu0 0.0
    %617 = vmatpush1.xpose.msra.mxu0 0.0
    %618 = vmatprep.subr.mxu0 0.0
    %619 = vmatpush1.xpose.msra.mxu0 0.0
    %620 = vmatprep.subr.mxu0 0.0
    %621 = vmatpush1.xpose.msra.mxu0 0.0
    %622 = vmatprep.subr.mxu0 0.0
    %623 = vmatpush1.xpose.msra.mxu0 0.0
    %624 = vmatprep.subr.mxu0 0.0
    %625 = vmatpush1.xpose.msra.mxu0 0.0
    %626 = vmatprep.subr.mxu0 0.0
    %627 = vmatpush1.xpose.msra.mxu0 0.0
    %628 = vmatprep.subr.mxu0 0.0
    %629 = vmatpush1.xpose.msra.mxu0 0.0
    %630 = vmatprep.subr.mxu0 0.0
    %631 = vmatpush1.xpose.msra.mxu0 0.0
    %632 = vmatprep.subr.mxu0 0.0
    %633 = vmatpush1.xpose.msra.mxu0 0.0
    %634 = vmatprep.subr.mxu0 0.0
    %635 = vmatpush1.xpose.msra.mxu0 0.0
    %636 = vmatprep.subr.mxu0 0.0
    %637 = vmatpush1.xpose.msra.mxu0 0.0
    %638 = vmatprep.subr.mxu0 0.0
    %639 = vmatpush1.xpose.msra.mxu0 0.0
    %640 = vmatprep.subr.mxu0 0.0
    %641 = vmatpush1.xpose.msra.mxu0 0.0
    %642 = vmatprep.mubr.f32.mxu0 0.0
    %643 = vmatmul.mubr.f32.gmra.mrb[0].mxu0 %v576
    %v644 = vpop.f32.mrb[0].mxu0
    %v645 = vadd.f32 %v78, %v644
    %v646 = vpop.f32.mrb[0].mxu0
    %647 = vmatprep.mubr.f32.mxu0 0.0
    %648 = vmatmul.mubr.f32.gmra.mrb[0].mxu0 %v577
    %v649 = vpop.f32.mrb[0].mxu0
    %v650 = vadd.f32 %v79, %v649
    %v651 = vpop.f32.mrb[0].mxu0
    %652 = vdwg.mxu0
    %vm653 = vcmask 130048
    %v654 = vsel %vm653, %v645, -inf
    %655 = vmax.xlane.f32.xlu0 %v654
    %v656 = vpop.xlane.xlu0 %655
    %v657 = vsel %vm653, %v650, -inf
    %658 = vmax.xlane.f32.xlu0 %v657
    %v659 = vpop.xlane.xlu0 %658
    %v660 = vsub.f32 %v645, %v656
    %v661 = vsub.f32 %v650, %v659
    %v662 = vmul.f32 %v660, 1.442695
    %v663 = vpow.pop %v662
    %v664 = vmul.f32 %v661, 1.442695
    %v665 = vpow.pop %v664
    %v666 = vsel %vm653, %v663, 0.0
    %667 = vadd.xlane.f32.xlu0 %v666
    %v668 = vpop.xlane.xlu0 %667
    %v669 = vsel %vm653, %v665, 0.0
    %670 = vadd.xlane.f32.xlu0 %v669
    %v671 = vpop.xlane.xlu0 %670
    %v672 = vrcp.pop %v668
    %v673 = vrcp.pop %v671
    %v674 = vmul.f32 %v663, %v672
    %v675 = vmul.f32 %v665, %v673
    %v676 = vmul.f32 %v570, %v575
    %v677 = vmul.f32 %v571, %v575
    %v678 = vlaneseq
    %v679 = vshrl.u32 %v678, 7
    %v680 = vsub.s32 5, %v679
    %v681 = vrot.slane %v77, %v680
    %v682 = vmul.f32 %v558, %v681
    %v683 = vmul.f32 %v559, %v681
    %684 = vmatprep.subr.mxu0 0.0
    %685 = vmatpush1.xpose.msra.mxu0 %v564
    %686 = vmatprep.subr.mxu0 0.0
    %687 = vmatpush1.xpose.msra.mxu0 %v565
    %688 = vmatprep.subr.mxu0 0.0
    %689 = vmatpush1.xpose.msra.mxu0 0.0
    %690 = vmatprep.subr.mxu0 0.0
    %691 = vmatpush1.xpose.msra.mxu0 0.0
    %692 = vmatprep.subr.mxu0 0.0
    %693 = vmatpush1.xpose.msra.mxu0 0.0
    %694 = vmatprep.subr.mxu0 0.0
    %695 = vmatpush1.xpose.msra.mxu0 0.0
    %696 = vmatprep.subr.mxu0 0.0
    %697 = vmatpush1.xpose.msra.mxu0 0.0
    %698 = vmatprep.subr.mxu0 0.0
    %699 = vmatpush1.xpose.msra.mxu0 0.0
    %700 = vmatprep.subr.mxu0 0.0
    %701 = vmatpush1.xpose.msra.mxu0 0.0
    %702 = vmatprep.subr.mxu0 0.0
    %703 = vmatpush1.xpose.msra.mxu0 0.0
    %704 = vmatprep.subr.mxu0 0.0
    %705 = vmatpush1.xpose.msra.mxu0 0.0
    %706 = vmatprep.subr.mxu0 0.0
    %707 = vmatpush1.xpose.msra.mxu0 0.0
    %708 = vmatprep.subr.mxu0 0.0
    %709 = vmatpush1.xpose.msra.mxu0 0.0
    %710 = vmatprep.subr.mxu0 0.0
    %711 = vmatpush1.xpose.msra.mxu0 0.0
    %712 = vmatprep.subr.mxu0 0.0
    %713 = vmatpush1.xpose.msra.mxu0 0.0
    %714 = vmatprep.subr.mxu0 0.0
    %715 = vmatpush1.xpose.msra.mxu0 0.0
    %716 = vmatprep.subr.mxu0 0.0
    %717 = vmatpush1.xpose.msra.mxu0 0.0
    %718 = vmatprep.subr.mxu0 0.0
    %719 = vmatpush1.xpose.msra.mxu0 0.0
    %720 = vmatprep.subr.mxu0 0.0
    %721 = vmatpush1.xpose.msra.mxu0 0.0
    %722 = vmatprep.subr.mxu0 0.0
    %723 = vmatpush1.xpose.msra.mxu0 0.0
    %724 = vmatprep.subr.mxu0 0.0
    %725 = vmatpush1.xpose.msra.mxu0 0.0
    %726 = vmatprep.subr.mxu0 0.0
    %727 = vmatpush1.xpose.msra.mxu0 0.0
    %728 = vmatprep.subr.mxu0 0.0
    %729 = vmatpush1.xpose.msra.mxu0 0.0
    %730 = vmatprep.subr.mxu0 0.0
    %731 = vmatpush1.xpose.msra.mxu0 0.0
    %732 = vmatprep.subr.mxu0 0.0
    %733 = vmatpush1.xpose.msra.mxu0 0.0
    %734 = vmatprep.subr.mxu0 0.0
    %735 = vmatpush1.xpose.msra.mxu0 0.0
    %736 = vmatprep.subr.mxu0 0.0
    %737 = vmatpush1.xpose.msra.mxu0 0.0
    %738 = vmatprep.subr.mxu0 0.0
    %739 = vmatpush1.xpose.msra.mxu0 0.0
    %740 = vmatprep.subr.mxu0 0.0
    %741 = vmatpush1.xpose.msra.mxu0 0.0
    %742 = vmatprep.subr.mxu0 0.0
    %743 = vmatpush1.xpose.msra.mxu0 0.0
    %744 = vmatprep.subr.mxu0 0.0
    %745 = vmatpush1.xpose.msra.mxu0 0.0
    %746 = vmatprep.subr.mxu0 0.0
    %747 = vmatpush1.xpose.msra.mxu0 0.0
    %748 = vmatprep.mubr.f32.mxu0 0.0
    %749 = vmatmul.mubr.f32.gmra.mrb[0].mxu0 %v682
    %v750 = vpop.f32.mrb[0].mxu0
    %v751 = vadd.f32 %v78, %v750
    %v752 = vpop.f32.mrb[0].mxu0
    %753 = vmatprep.mubr.f32.mxu0 0.0
    %754 = vmatmul.mubr.f32.gmra.mrb[0].mxu0 %v683
    %v755 = vpop.f32.mrb[0].mxu0
    %v756 = vadd.f32 %v79, %v755
    %v757 = vpop.f32.mrb[0].mxu0
    %758 = vdwg.mxu0
    %v759 = vsel %vm653, %v751, -inf
    %760 = vmax.xlane.f32.xlu0 %v759
    %v761 = vpop.xlane.xlu0 %760
    %v762 = vsel %vm653, %v756, -inf
    %763 = vmax.xlane.f32.xlu0 %v762
    %v764 = vpop.xlane.xlu0 %763
    %v765 = vsub.f32 %v751, %v761
    %v766 = vsub.f32 %v756, %v764
    %v767 = vmul.f32 %v765, 1.442695
    %v768 = vpow.pop %v767
    %v769 = vmul.f32 %v766, 1.442695
    %v770 = vpow.pop %v769
    %v771 = vsel %vm653, %v768, 0.0
    %772 = vadd.xlane.f32.xlu0 %v771
    %v773 = vpop.xlane.xlu0 %772
    %v774 = vsel %vm653, %v770, 0.0
    %775 = vadd.xlane.f32.xlu0 %v774
    %v776 = vpop.xlane.xlu0 %775
    %v777 = vrcp.pop %v773
    %v778 = vrcp.pop %v776
    %v779 = vmul.f32 %v768, %v777
    %v780 = vmul.f32 %v770, %v778
    %v781 = vmul.f32 %v570, %v681
    %v782 = vmul.f32 %v571, %v681
    %v784 = vsel %vm653, %v779, 0
    %v787 = vsel %vm653, %v780, 0
    %789 = vmatprep.subr.mxu0 0.0
    %790 = vmatpush1.msra.mxu0 %v781
    %791 = vmatprep.subr.mxu0 0.0
    %792 = vmatpush1.msra.mxu0 %v782
    %793 = vmatprep.subr.mxu0 0.0
    %794 = vmatpush1.msra.mxu0 0.0
    %795 = vmatprep.subr.mxu0 0.0
    %796 = vmatpush1.msra.mxu0 0.0
    %797 = vmatprep.subr.mxu0 0.0
    %798 = vmatpush1.msra.mxu0 0.0
    %799 = vmatprep.subr.mxu0 0.0
    %800 = vmatpush1.msra.mxu0 0.0
    %801 = vmatprep.subr.mxu0 0.0
    %802 = vmatpush1.msra.mxu0 0.0
    %803 = vmatprep.subr.mxu0 0.0
    %804 = vmatpush1.msra.mxu0 0.0
    %805 = vmatprep.subr.mxu0 0.0
    %806 = vmatpush1.msra.mxu0 0.0
    %807 = vmatprep.subr.mxu0 0.0
    %808 = vmatpush1.msra.mxu0 0.0
    %809 = vmatprep.subr.mxu0 0.0
    %810 = vmatpush1.msra.mxu0 0.0
    %811 = vmatprep.subr.mxu0 0.0
    %812 = vmatpush1.msra.mxu0 0.0
    %813 = vmatprep.subr.mxu0 0.0
    %814 = vmatpush1.msra.mxu0 0.0
    %815 = vmatprep.subr.mxu0 0.0
    %816 = vmatpush1.msra.mxu0 0.0
    %817 = vmatprep.subr.mxu0 0.0
    %818 = vmatpush1.msra.mxu0 0.0
    %819 = vmatprep.subr.mxu0 0.0
    %820 = vmatpush1.msra.mxu0 0.0
    %821 = vmatprep.subr.mxu0 0.0
    %822 = vmatpush1.msra.mxu0 0.0
    %823 = vmatprep.subr.mxu0 0.0
    %824 = vmatpush1.msra.mxu0 0.0
    %825 = vmatprep.subr.mxu0 0.0
    %826 = vmatpush1.msra.mxu0 0.0
    %827 = vmatprep.subr.mxu0 0.0
    %828 = vmatpush1.msra.mxu0 0.0
    %829 = vmatprep.subr.mxu0 0.0
    %830 = vmatpush1.msra.mxu0 0.0
    %831 = vmatprep.subr.mxu0 0.0
    %832 = vmatpush1.msra.mxu0 0.0
    %833 = vmatprep.subr.mxu0 0.0
    %834 = vmatpush1.msra.mxu0 0.0
    %835 = vmatprep.subr.mxu0 0.0
    %836 = vmatpush1.msra.mxu0 0.0
    %837 = vmatprep.subr.mxu0 0.0
    %838 = vmatpush1.msra.mxu0 0.0
    %839 = vmatprep.subr.mxu0 0.0
    %840 = vmatpush1.msra.mxu0 0.0
    %841 = vmatprep.subr.mxu0 0.0
    %842 = vmatpush1.msra.mxu0 0.0
    %843 = vmatprep.subr.mxu0 0.0
    %844 = vmatpush1.msra.mxu0 0.0
    %845 = vmatprep.subr.mxu0 0.0
    %846 = vmatpush1.msra.mxu0 0.0
    %847 = vmatprep.subr.mxu0 0.0
    %848 = vmatpush1.msra.mxu0 0.0
    %849 = vmatprep.subr.mxu0 0.0
    %850 = vmatpush1.msra.mxu0 0.0
    %851 = vmatprep.subr.mxu0 0.0
    %852 = vmatpush1.msra.mxu0 0.0
    %853 = vmatprep.mubr.f32.mxu0 0.0
    %854 = vmatmul.mubr.f32.gmra.mrb[0].mxu0 %v784
    %v855 = vpop.f32.mrb[0].mxu0
    %v856 = vadd.f32 0.0, %v855
    %v857 = vpop.f32.mrb[0].mxu0
    %858 = vmatprep.mubr.f32.mxu0 0.0
    %859 = vmatmul.mubr.f32.gmra.mrb[0].mxu0 %v787
    %v860 = vpop.f32.mrb[0].mxu0
    %v861 = vadd.f32 0.0, %v860
    %v862 = vpop.f32.mrb[0].mxu0
    %863 = vdwg.mxu0
    %v865 = vsel %vm653, %v674, 0
    %v868 = vsel %vm653, %v675, 0
    %870 = vmatprep.subr.mxu0 0.0
    %871 = vmatpush1.msra.mxu0 %v676
    %872 = vmatprep.subr.mxu0 0.0
    %873 = vmatpush1.msra.mxu0 %v677
    %874 = vmatprep.subr.mxu0 0.0
    %875 = vmatpush1.msra.mxu0 0.0
    %876 = vmatprep.subr.mxu0 0.0
    %877 = vmatpush1.msra.mxu0 0.0
    %878 = vmatprep.subr.mxu0 0.0
    %879 = vmatpush1.msra.mxu0 0.0
    %880 = vmatprep.subr.mxu0 0.0
    %881 = vmatpush1.msra.mxu0 0.0
    %882 = vmatprep.subr.mxu0 0.0
    %883 = vmatpush1.msra.mxu0 0.0
    %884 = vmatprep.subr.mxu0 0.0
    %885 = vmatpush1.msra.mxu0 0.0
    %886 = vmatprep.subr.mxu0 0.0
    %887 = vmatpush1.msra.mxu0 0.0
    %888 = vmatprep.subr.mxu0 0.0
    %889 = vmatpush1.msra.mxu0 0.0
    %890 = vmatprep.subr.mxu0 0.0
    %891 = vmatpush1.msra.mxu0 0.0
    %892 = vmatprep.subr.mxu0 0.0
    %893 = vmatpush1.msra.mxu0 0.0
    %894 = vmatprep.subr.mxu0 0.0
    %895 = vmatpush1.msra.mxu0 0.0
    %896 = vmatprep.subr.mxu0 0.0
    %897 = vmatpush1.msra.mxu0 0.0
    %898 = vmatprep.subr.mxu0 0.0
    %899 = vmatpush1.msra.mxu0 0.0
    %900 = vmatprep.subr.mxu0 0.0
    %901 = vmatpush1.msra.mxu0 0.0
    %902 = vmatprep.subr.mxu0 0.0
    %903 = vmatpush1.msra.mxu0 0.0
    %904 = vmatprep.subr.mxu0 0.0
    %905 = vmatpush1.msra.mxu0 0.0
    %906 = vmatprep.subr.mxu0 0.0
    %907 = vmatpush1.msra.mxu0 0.0
    %908 = vmatprep.subr.mxu0 0.0
    %909 = vmatpush1.msra.mxu0 0.0
    %910 = vmatprep.subr.mxu0 0.0
    %911 = vmatpush1.msra.mxu0 0.0
    %912 = vmatprep.subr.mxu0 0.0
    %913 = vmatpush1.msra.mxu0 0.0
    %914 = vmatprep.subr.mxu0 0.0
    %915 = vmatpush1.msra.mxu0 0.0
    %916 = vmatprep.subr.mxu0 0.0
    %917 = vmatpush1.msra.mxu0 0.0
    %918 = vmatprep.subr.mxu0 0.0
    %919 = vmatpush1.msra.mxu0 0.0
    %920 = vmatprep.subr.mxu0 0.0
    %921 = vmatpush1.msra.mxu0 0.0
    %922 = vmatprep.subr.mxu0 0.0
    %923 = vmatpush1.msra.mxu0 0.0
    %924 = vmatprep.subr.mxu0 0.0
    %925 = vmatpush1.msra.mxu0 0.0
    %926 = vmatprep.subr.mxu0 0.0
    %927 = vmatpush1.msra.mxu0 0.0
    %928 = vmatprep.subr.mxu0 0.0
    %929 = vmatpush1.msra.mxu0 0.0
    %930 = vmatprep.subr.mxu0 0.0
    %931 = vmatpush1.msra.mxu0 0.0
    %932 = vmatprep.subr.mxu0 0.0
    %933 = vmatpush1.msra.mxu0 0.0
    %934 = vmatprep.mubr.f32.mxu0 0.0
    %935 = vmatmul.mubr.f32.gmra.mrb[0].mxu0 %v865
    %v936 = vpop.f32.mrb[0].mxu0
    %v937 = vadd.f32 %v856, %v936
    %v938 = vpop.f32.mrb[0].mxu0
    %939 = vmatprep.mubr.f32.mxu0 0.0
    %940 = vmatmul.mubr.f32.gmra.mrb[0].mxu0 %v868
    %v941 = vpop.f32.mrb[0].mxu0
    %v942 = vadd.f32 %v861, %v941
    %v943 = vpop.f32.mrb[0].mxu0
    %944 = vdwg.mxu0
    %v945 = vpack.c.bf16 %v942, %v937
    %v946 = vld [vmem:[%s7] sm:$0xf]
    %v947 = vld [vmem:[%s7 + $0x4] sm:$0xf]
    %v948 = vld [vmem:[%s7 + $0x8] sm:$0xf]
    %v949 = vld [vmem:[%s7 + $0xc] sm:$0xf]
    %v950 = vld [vmem:[%s7 + $0x10] sm:$0xf]
    %v951 = vld [vmem:[%s7 + $0x14] sm:$0xf]
    %v952 = vld [vmem:[%s7 + $0x18] sm:$0xf]
    %v953 = vld [vmem:[%s7 + $0x1c] sm:$0xf]
    %v954 = vld [vmem:[%s7 + $0x20] sm:$0xf]
    %v955 = vld [vmem:[%s7 + $0x24] sm:$0xf]
    %v956 = vld [vmem:[%s7 + $0x28] sm:$0xf]
    %v957 = vld [vmem:[%s7 + $0x2c] sm:$0xf]
    %v958 = vld [vmem:[%s7 + $0x30] sm:$0xf]
    %v959 = vld [vmem:[%s7 + $0x34] sm:$0xf]
    %v960 = vld [vmem:[%s7 + $0x38] sm:$0xf]
    %v961 = vld [vmem:[%s7 + $0x3c] sm:$0xf]
    %v978 = vunpack.c.l.b16 %v946
    %v979 = vunpack.c.l.b16 %v947
    %v980 = vunpack.c.l.b16 %v948
    %v981 = vunpack.c.l.b16 %v949
    %v982 = vunpack.c.l.b16 %v950
    %v983 = vunpack.c.l.b16 %v951
    %v984 = vunpack.c.l.b16 %v952
    %v985 = vunpack.c.l.b16 %v953
    %v986 = vunpack.c.l.b16 %v954
    %v987 = vunpack.c.l.b16 %v955
    %v988 = vunpack.c.l.b16 %v956
    %v989 = vunpack.c.l.b16 %v957
    %v990 = vunpack.c.l.b16 %v958
    %v991 = vunpack.c.l.b16 %v959
    %v992 = vunpack.c.l.b16 %v960
    %v993 = vunpack.c.l.b16 %v961
    %v994 = vpack.c.b16 %v979, %v978
    %v995 = vpack.c.b16 %v981, %v980
    %v996 = vpack.c.b16 %v983, %v982
    %v997 = vpack.c.b16 %v985, %v984
    %v998 = vpack.c.b16 %v987, %v986
    %v999 = vpack.c.b16 %v989, %v988
    %v1000 = vpack.c.b16 %v991, %v990
    %v1001 = vpack.c.b16 %v993, %v992
    %1010 = vmatprep.subr.bf16.mxu0 0
    %1011 = vmatpush1.bf16.msra.mxu0 %v994
    %1012 = vmatprep.subr.bf16.mxu0 0
    %1013 = vmatpush1.bf16.msra.mxu0 %v995
    %1014 = vmatprep.subr.bf16.mxu0 0
    %1015 = vmatpush1.bf16.msra.mxu0 %v996
    %1016 = vmatprep.subr.bf16.mxu0 0
    %1017 = vmatpush1.bf16.msra.mxu0 %v997
    %1018 = vmatprep.subr.bf16.mxu0 0
    %1019 = vmatpush1.bf16.msra.mxu0 %v998
    %1020 = vmatprep.subr.bf16.mxu0 0
    %1021 = vmatpush1.bf16.msra.mxu0 %v999
    %1022 = vmatprep.subr.bf16.mxu0 0
    %1023 = vmatpush1.bf16.msra.mxu0 %v1000
    %1024 = vmatprep.subr.bf16.mxu0 0
    %1025 = vmatpush1.bf16.msra.mxu0 %v1001
    %1026 = vmatprep.subr.bf16.mxu0 0
    %1027 = vmatpush1.bf16.msra.mxu0 0
    %1028 = vmatprep.subr.bf16.mxu0 0
    %1029 = vmatpush1.bf16.msra.mxu0 0
    %1030 = vmatprep.subr.bf16.mxu0 0
    %1031 = vmatpush1.bf16.msra.mxu0 0
    %1032 = vmatprep.subr.bf16.mxu0 0
    %1033 = vmatpush1.bf16.msra.mxu0 0
    %1034 = vmatprep.subr.bf16.mxu0 0
    %1035 = vmatpush1.bf16.msra.mxu0 0
    %1036 = vmatprep.subr.bf16.mxu0 0
    %1037 = vmatpush1.bf16.msra.mxu0 0
    %1038 = vmatprep.subr.bf16.mxu0 0
    %1039 = vmatpush1.bf16.msra.mxu0 0
    %1040 = vmatprep.subr.bf16.mxu0 0
    %1041 = vmatpush1.bf16.msra.mxu0 0
    %1042 = vmatprep.mubr.bf16.mxu0 0
    %1043 = vmatmul.mubr.bf16.gmra.mrb[0].mxu0 %v945
    %v1044 = vpop.f32.mrb[0].mxu0
    %v1045 = vadd.f32 0.0, %v1044
    %v1046 = vpop.f32.mrb[0].mxu0
    %v1047 = vpop.f32.mrb[0].mxu0
    %v1048 = vadd.f32 0.0, %v1047
    %v1049 = vpop.f32.mrb[0].mxu0
    %1050 = vdwg.mxu0
    %v1051 = vadd.f32 %v267, %v1045
    %v1052 = vadd.f32 %v268, %v1048
    %v1053 = vlaneseq
    %v1054 = vshrl.u32 %v1053, 7
    %v1055 = vsub.s32 7, %v1054
    %v1056 = vrot.slane %v269, %v1055
    %v1057 = vadd.f32 %v1051, %v1056
    %v1058 = vadd.f32 %v1052, %v1056
    %1059 = vadd.xlane.f32.xlu0 %v1057
    %v1060 = vpop.xlane.xlu0 %1059
    %1061 = vadd.xlane.f32.xlu0 %v1058
    %v1062 = vpop.xlane.xlu0 %1061
    %v1063 = vmul.f32 %v1060, 0.03125
    %v1064 = vmul.f32 %v1062, 0.03125
    %v1065 = vmul.f32 %v1057, %v1057
    %v1066 = vmul.f32 %v1058, %v1058
    %1067 = vadd.xlane.f32.xlu0 %v1065
    %v1068 = vpop.xlane.xlu0 %1067
    %1069 = vadd.xlane.f32.xlu0 %v1066
    %v1070 = vpop.xlane.xlu0 %1069
    %v1071 = vmul.f32 %v1068, 0.03125
    %v1072 = vmul.f32 %v1070, 0.03125
    %v1073 = vmul.f32 %v1063, %v1063
    %v1074 = vmul.f32 %v1064, %v1064
    %v1075 = vsub.f32 %v1071, %v1073
    %v1076 = vsub.f32 %v1072, %v1074
    %v1077 = vsub.f32 %v1057, %v1063
    %v1078 = vsub.f32 %v1058, %v1064
    %v1079 = vadd.f32 %v1075, 1e-05
    %v1080 = vadd.f32 %v1076, 1e-05
    %v1081 = vrsqrt.pop %v1079
    %v1082 = vrsqrt.pop %v1080
    %v1083 = vmul.f32 %v1077, %v1081
    %v1084 = vmul.f32 %v1078, %v1082
    %v1085 = vlaneseq
    %v1086 = vshrl.u32 %v1085, 7
    %v1087 = vsub.s32 2, %v1086
    %v1088 = vrot.slane %v269, %v1087
    %v1089 = vmul.f32 %v1083, %v1088
    %v1090 = vmul.f32 %v1084, %v1088
    %v1091 = vlaneseq
    %v1092 = vshrl.u32 %v1091, 7
    %v1093 = vsub.s32 3, %v1092
    %v1094 = vrot.slane %v269, %v1093
    %v1095 = vadd.f32 %v1089, %v1094
    %v1096 = vadd.f32 %v1090, %v1094
    %v1097 = vpack.c.bf16 %v1096, %v1095
    %v1098 = vld [vmem:[%s8] sm:$0xf]
    %v1099 = vld [vmem:[%s8 + $0x4] sm:$0xf]
    %v1100 = vld [vmem:[%s8 + $0x8] sm:$0xf]
    %v1101 = vld [vmem:[%s8 + $0xc] sm:$0xf]
    %v1102 = vld [vmem:[%s8 + $0x10] sm:$0xf]
    %v1103 = vld [vmem:[%s8 + $0x14] sm:$0xf]
    %v1104 = vld [vmem:[%s8 + $0x18] sm:$0xf]
    %v1105 = vld [vmem:[%s8 + $0x1c] sm:$0xf]
    %v1106 = vld [vmem:[%s8 + $0x20] sm:$0xf]
    %v1107 = vld [vmem:[%s8 + $0x24] sm:$0xf]
    %v1108 = vld [vmem:[%s8 + $0x28] sm:$0xf]
    %v1109 = vld [vmem:[%s8 + $0x2c] sm:$0xf]
    %v1110 = vld [vmem:[%s8 + $0x30] sm:$0xf]
    %v1111 = vld [vmem:[%s8 + $0x34] sm:$0xf]
    %v1112 = vld [vmem:[%s8 + $0x38] sm:$0xf]
    %v1113 = vld [vmem:[%s8 + $0x3c] sm:$0xf]
    %v1114 = vlaneseq
    %v1115 = vshrl.u32 %v1114, 7
    %v1116 = vsub.s32 0, %v1115
    %v1117 = vrot.slane %v270, %v1116
    %v1134 = vunpack.c.l.b16 %v1098
    %v1135 = vunpack.c.l.b16 %v1099
    %v1136 = vunpack.c.l.b16 %v1100
    %v1137 = vunpack.c.l.b16 %v1101
    %v1138 = vunpack.c.l.b16 %v1102
    %v1139 = vunpack.c.l.b16 %v1103
    %v1140 = vunpack.c.l.b16 %v1104
    %v1141 = vunpack.c.l.b16 %v1105
    %v1142 = vunpack.c.l.b16 %v1106
    %v1143 = vunpack.c.l.b16 %v1107
    %v1144 = vunpack.c.l.b16 %v1108
    %v1145 = vunpack.c.l.b16 %v1109
    %v1146 = vunpack.c.l.b16 %v1110
    %v1147 = vunpack.c.l.b16 %v1111
    %v1148 = vunpack.c.l.b16 %v1112
    %v1149 = vunpack.c.l.b16 %v1113
    %v1150 = vpack.c.b16 %v1135, %v1134
    %v1151 = vpack.c.b16 %v1137, %v1136
    %v1152 = vpack.c.b16 %v1139, %v1138
    %v1153 = vpack.c.b16 %v1141, %v1140
    %v1154 = vpack.c.b16 %v1143, %v1142
    %v1155 = vpack.c.b16 %v1145, %v1144
    %v1156 = vpack.c.b16 %v1147, %v1146
    %v1157 = vpack.c.b16 %v1149, %v1148
    %1166 = vmatprep.subr.bf16.mxu0 0
    %1167 = vmatpush1.bf16.msra.mxu0 %v1150
    %1168 = vmatprep.subr.bf16.mxu0 0
    %1169 = vmatpush1.bf16.msra.mxu0 %v1151
    %1170 = vmatprep.subr.bf16.mxu0 0
    %1171 = vmatpush1.bf16.msra.mxu0 %v1152
    %1172 = vmatprep.subr.bf16.mxu0 0
    %1173 = vmatpush1.bf16.msra.mxu0 %v1153
    %1174 = vmatprep.subr.bf16.mxu0 0
    %1175 = vmatpush1.bf16.msra.mxu0 %v1154
    %1176 = vmatprep.subr.bf16.mxu0 0
    %1177 = vmatpush1.bf16.msra.mxu0 %v1155
    %1178 = vmatprep.subr.bf16.mxu0 0
    %1179 = vmatpush1.bf16.msra.mxu0 %v1156
    %1180 = vmatprep.subr.bf16.mxu0 0
    %1181 = vmatpush1.bf16.msra.mxu0 %v1157
    %1182 = vmatprep.subr.bf16.mxu0 0
    %1183 = vmatpush1.bf16.msra.mxu0 0
    %1184 = vmatprep.subr.bf16.mxu0 0
    %1185 = vmatpush1.bf16.msra.mxu0 0
    %1186 = vmatprep.subr.bf16.mxu0 0
    %1187 = vmatpush1.bf16.msra.mxu0 0
    %1188 = vmatprep.subr.bf16.mxu0 0
    %1189 = vmatpush1.bf16.msra.mxu0 0
    %1190 = vmatprep.subr.bf16.mxu0 0
    %1191 = vmatpush1.bf16.msra.mxu0 0
    %1192 = vmatprep.subr.bf16.mxu0 0
    %1193 = vmatpush1.bf16.msra.mxu0 0
    %1194 = vmatprep.subr.bf16.mxu0 0
    %1195 = vmatpush1.bf16.msra.mxu0 0
    %1196 = vmatprep.subr.bf16.mxu0 0
    %1197 = vmatpush1.bf16.msra.mxu0 0
    %1198 = vmatprep.mubr.bf16.mxu0 0
    %1199 = vmatmul.mubr.bf16.gmra.mrb[0].mxu0 %v1097
    %v1200 = vpop.f32.mrb[0].mxu0
    %v1201 = vadd.f32 %v1117, %v1200
    %v1202 = vpop.f32.mrb[0].mxu0
    %v1203 = vpop.f32.mrb[0].mxu0
    %v1204 = vadd.f32 %v1117, %v1203
    %v1205 = vpop.f32.mrb[0].mxu0
    %1206 = vdwg.mxu0
    %v1207 = vmul.f32 %v1201, 1.702
    %v1208 = vmul.f32 %v1204, 1.702
    %v1209 = vxor.u32 %v1207, 2147483648
    %v1210 = vxor.u32 %v1208, 2147483648
    %v1211 = vmul.f32 %v1209, 1.442695
    %v1212 = vpow.pop %v1211
    %v1213 = vmul.f32 %v1210, 1.442695
    %v1214 = vpow.pop %v1213
    %v1215 = vadd.f32 %v1212, 1.0
    %v1216 = vadd.f32 %v1214, 1.0
    %v1217 = vrcp.pop %v1215
    %v1218 = vmul.f32 1.0, %v1217
    %v1219 = vrcp.pop %v1216
    %v1220 = vmul.f32 1.0, %v1219
    %v1221 = vmul.f32 %v1201, %v1218
    %v1222 = vmul.f32 %v1204, %v1220
    %v1223 = vpack.c.bf16 %v1222, %v1221
    %s1224 = scalar_lea.vmem %s8, 64
    %v1225 = vld [vmem:[%s1224] sm:$0xf]
    %v1226 = vld [vmem:[%s1224 + $0x4] sm:$0xf]
    %v1227 = vld [vmem:[%s1224 + $0x8] sm:$0xf]
    %v1228 = vld [vmem:[%s1224 + $0xc] sm:$0xf]
    %v1229 = vld [vmem:[%s1224 + $0x10] sm:$0xf]
    %v1230 = vld [vmem:[%s1224 + $0x14] sm:$0xf]
    %v1231 = vld [vmem:[%s1224 + $0x18] sm:$0xf]
    %v1232 = vld [vmem:[%s1224 + $0x1c] sm:$0xf]
    %v1233 = vld [vmem:[%s1224 + $0x20] sm:$0xf]
    %v1234 = vld [vmem:[%s1224 + $0x24] sm:$0xf]
    %v1235 = vld [vmem:[%s1224 + $0x28] sm:$0xf]
    %v1236 = vld [vmem:[%s1224 + $0x2c] sm:$0xf]
    %v1237 = vld [vmem:[%s1224 + $0x30] sm:$0xf]
    %v1238 = vld [vmem:[%s1224 + $0x34] sm:$0xf]
    %v1239 = vld [vmem:[%s1224 + $0x38] sm:$0xf]
    %v1240 = vld [vmem:[%s1224 + $0x3c] sm:$0xf]
    %v1241 = vlaneseq
    %v1242 = vshrl.u32 %v1241, 7
    %v1243 = vsub.s32 1, %v1242
    %v1244 = vrot.slane %v270, %v1243
    %v1261 = vunpack.c.l.b16 %v1225
    %v1262 = vunpack.c.l.b16 %v1226
    %v1263 = vunpack.c.l.b16 %v1227
    %v1264 = vunpack.c.l.b16 %v1228
    %v1265 = vunpack.c.l.b16 %v1229
    %v1266 = vunpack.c.l.b16 %v1230
    %v1267 = vunpack.c.l.b16 %v1231
    %v1268 = vunpack.c.l.b16 %v1232
    %v1269 = vunpack.c.l.b16 %v1233
    %v1270 = vunpack.c.l.b16 %v1234
    %v1271 = vunpack.c.l.b16 %v1235
    %v1272 = vunpack.c.l.b16 %v1236
    %v1273 = vunpack.c.l.b16 %v1237
    %v1274 = vunpack.c.l.b16 %v1238
    %v1275 = vunpack.c.l.b16 %v1239
    %v1276 = vunpack.c.l.b16 %v1240
    %v1277 = vpack.c.b16 %v1262, %v1261
    %v1278 = vpack.c.b16 %v1264, %v1263
    %v1279 = vpack.c.b16 %v1266, %v1265
    %v1280 = vpack.c.b16 %v1268, %v1267
    %v1281 = vpack.c.b16 %v1270, %v1269
    %v1282 = vpack.c.b16 %v1272, %v1271
    %v1283 = vpack.c.b16 %v1274, %v1273
    %v1284 = vpack.c.b16 %v1276, %v1275
    %1293 = vmatprep.subr.bf16.mxu0 0
    %1294 = vmatpush1.bf16.msra.mxu0 %v1277
    %1295 = vmatprep.subr.bf16.mxu0 0
    %1296 = vmatpush1.bf16.msra.mxu0 %v1278
    %1297 = vmatprep.subr.bf16.mxu0 0
    %1298 = vmatpush1.bf16.msra.mxu0 %v1279
    %1299 = vmatprep.subr.bf16.mxu0 0
    %1300 = vmatpush1.bf16.msra.mxu0 %v1280
    %1301 = vmatprep.subr.bf16.mxu0 0
    %1302 = vmatpush1.bf16.msra.mxu0 %v1281
    %1303 = vmatprep.subr.bf16.mxu0 0
    %1304 = vmatpush1.bf16.msra.mxu0 %v1282
    %1305 = vmatprep.subr.bf16.mxu0 0
    %1306 = vmatpush1.bf16.msra.mxu0 %v1283
    %1307 = vmatprep.subr.bf16.mxu0 0
    %1308 = vmatpush1.bf16.msra.mxu0 %v1284
    %1309 = vmatprep.subr.bf16.mxu0 0
    %1310 = vmatpush1.bf16.msra.mxu0 0
    %1311 = vmatprep.subr.bf16.mxu0 0
    %1312 = vmatpush1.bf16.msra.mxu0 0
    %1313 = vmatprep.subr.bf16.mxu0 0
    %1314 = vmatpush1.bf16.msra.mxu0 0
    %1315 = vmatprep.subr.bf16.mxu0 0
    %1316 = vmatpush1.bf16.msra.mxu0 0
    %1317 = vmatprep.subr.bf16.mxu0 0
    %1318 = vmatpush1.bf16.msra.mxu0 0
    %1319 = vmatprep.subr.bf16.mxu0 0
    %1320 = vmatpush1.bf16.msra.mxu0 0
    %1321 = vmatprep.subr.bf16.mxu0 0
    %1322 = vmatpush1.bf16.msra.mxu0 0
    %1323 = vmatprep.subr.bf16.mxu0 0
    %1324 = vmatpush1.bf16.msra.mxu0 0
    %1325 = vmatprep.mubr.bf16.mxu0 0
    %1326 = vmatmul.mubr.bf16.gmra.mrb[0].mxu0 %v1223
    %v1327 = vpop.f32.mrb[0].mxu0
    %v1328 = vadd.f32 %v1244, %v1327
    %v1329 = vpop.f32.mrb[0].mxu0
    %v1330 = vpop.f32.mrb[0].mxu0
    %v1331 = vadd.f32 %v1244, %v1330
    %v1332 = vpop.f32.mrb[0].mxu0
    %1333 = vdwg.mxu0
    %v1334 = vadd.f32 %v1057, %v1328
    %v1335 = vadd.f32 %v1058, %v1331
    %s1336 = scalar_lea.vmem [#allocation6], 16
    %v1337 = vld [vmem:[%s1336] sm:$0xff]
    %v1338 = vld [vmem:[%s1336 + $0x8] sm:$0xff]
    %1339 = vadd.xlane.f32.xlu0 %v1334
    %v1340 = vpop.xlane.xlu0 %1339
    %1341 = vadd.xlane.f32.xlu0 %v1335
    %v1342 = vpop.xlane.xlu0 %1341
    %v1343 = vmul.f32 %v1340, 0.03125
    %v1344 = vmul.f32 %v1342, 0.03125
    %v1345 = vmul.f32 %v1334, %v1334
    %v1346 = vmul.f32 %v1335, %v1335
    %1347 = vadd.xlane.f32.xlu0 %v1345
    %v1348 = vpop.xlane.xlu0 %1347
    %1349 = vadd.xlane.f32.xlu0 %v1346
    %v1350 = vpop.xlane.xlu0 %1349
    %v1351 = vmul.f32 %v1348, 0.03125
    %v1352 = vmul.f32 %v1350, 0.03125
    %v1353 = vmul.f32 %v1343, %v1343
    %v1354 = vmul.f32 %v1344, %v1344
    %v1355 = vsub.f32 %v1351, %v1353
    %v1356 = vsub.f32 %v1352, %v1354
    %v1357 = vsub.f32 %v1334, %v1343
    %v1358 = vsub.f32 %v1335, %v1344
    %v1359 = vadd.f32 %v1355, 1e-05
    %v1360 = vadd.f32 %v1356, 1e-05
    %v1361 = vrsqrt.pop %v1359
    %v1362 = vrsqrt.pop %v1360
    %v1363 = vmul.f32 %v1357, %v1361
    %v1364 = vmul.f32 %v1358, %v1362
    %v1365 = vlaneseq
    %v1366 = vshrl.u32 %v1365, 7
    %v1367 = vsub.s32 0, %v1366
    %v1368 = vrot.slane %v1337, %v1367
    %v1369 = vmul.f32 %v1363, %v1368
    %v1370 = vmul.f32 %v1364, %v1368
    %v1371 = vlaneseq
    %v1372 = vshrl.u32 %v1371, 7
    %v1373 = vsub.s32 1, %v1372
    %v1374 = vrot.slane %v1337, %v1373
    %v1375 = vadd.f32 %v1369, %v1374
    %v1376 = vadd.f32 %v1370, %v1374
    %v1377 = vpack.c.bf16 %v1376, %v1375
    %s1378 = scalar_lea.vmem %s6, 192
    %v1379 = vld [vmem:[%s1378] sm:$0xff]
    %v1380 = vld [vmem:[%s1378 + $0x8] sm:$0xf]
    %v1381 = vld [vmem:[%s1378 + $0xc] sm:$0xff]
    %v1382 = vld [vmem:[%s1378 + $0x14] sm:$0xf]
    %v1383 = vld [vmem:[%s1378 + $0x18] sm:$0xff]
    %v1384 = vld [vmem:[%s1378 + $0x20] sm:$0xf]
    %v1385 = vld [vmem:[%s1378 + $0x24] sm:$0xff]
    %v1386 = vld [vmem:[%s1378 + $0x2c] sm:$0xf]
    %v1387 = vld [vmem:[%s1378 + $0x30] sm:$0xff]
    %v1388 = vld [vmem:[%s1378 + $0x38] sm:$0xf]
    %v1389 = vld [vmem:[%s1378 + $0x3c] sm:$0xff]
    %v1390 = vld [vmem:[%s1378 + $0x44] sm:$0xf]
    %v1391 = vld [vmem:[%s1378 + $0x48] sm:$0xff]
    %v1392 = vld [vmem:[%s1378 + $0x50] sm:$0xf]
    %v1393 = vld [vmem:[%s1378 + $0x54] sm:$0xff]
    %v1394 = vld [vmem:[%s1378 + $0x5c] sm:$0xf]
    %v1395 = vld [vmem:[%s1378 + $0x60] sm:$0xff]
    %v1396 = vld [vmem:[%s1378 + $0x68] sm:$0xf]
    %v1397 = vld [vmem:[%s1378 + $0x6c] sm:$0xff]
    %v1398 = vld [vmem:[%s1378 + $0x74] sm:$0xf]
    %v1399 = vld [vmem:[%s1378 + $0x78] sm:$0xff]
    %v1400 = vld [vmem:[%s1378 + $0x80] sm:$0xf]
    %v1401 = vld [vmem:[%s1378 + $0x84] sm:$0xff]
    %v1402 = vld [vmem:[%s1378 + $0x8c] sm:$0xf]
    %v1403 = vld [vmem:[%s1378 + $0x90] sm:$0xff]
    %v1404 = vld [vmem:[%s1378 + $0x98] sm:$0xf]
    %v1405 = vld [vmem:[%s1378 + $0x9c] sm:$0xff]
    %v1406 = vld [vmem:[%s1378 + $0xa4] sm:$0xf]
    %v1407 = vld [vmem:[%s1378 + $0xa8] sm:$0xff]
    %v1408 = vld [vmem:[%s1378 + $0xb0] sm:$0xf]
    %v1409 = vld [vmem:[%s1378 + $0xb4] sm:$0xff]
    %v1410 = vld [vmem:[%s1378 + $0xbc] sm:$0xf]
    %v1443 = vunpack.c.l.b16 %v1379
    %v1444 = vunpack.c.h.b16 %v1379
    %v1445 = vunpack.c.l.b16 %v1380
    %v1446 = vunpack.c.l.b16 %v1381
    %v1447 = vunpack.c.h.b16 %v1381
    %v1448 = vunpack.c.l.b16 %v1382
    %v1449 = vunpack.c.l.b16 %v1383
    %v1450 = vunpack.c.h.b16 %v1383
    %v1451 = vunpack.c.l.b16 %v1384
    %v1452 = vunpack.c.l.b16 %v1385
    %v1453 = vunpack.c.h.b16 %v1385
    %v1454 = vunpack.c.l.b16 %v1386
    %v1455 = vunpack.c.l.b16 %v1387
    %v1456 = vunpack.c.h.b16 %v1387
    %v1457 = vunpack.c.l.b16 %v1388
    %v1458 = vunpack.c.l.b16 %v1389
    %v1459 = vunpack.c.h.b16 %v1389
    %v1460 = vunpack.c.l.b16 %v1390
    %v1461 = vunpack.c.l.b16 %v1391
    %v1462 = vunpack.c.h.b16 %v1391
    %v1463 = vunpack.c.l.b16 %v1392
    %v1464 = vunpack.c.l.b16 %v1393
    %v1465 = vunpack.c.h.b16 %v1393
    %v1466 = vunpack.c.l.b16 %v1394
    %v1467 = vunpack.c.l.b16 %v1395
    %v1468 = vunpack.c.h.b16 %v1395
    %v1469 = vunpack.c.l.b16 %v1396
    %v1470 = vunpack.c.l.b16 %v1397
    %v1471 = vunpack.c.h.b16 %v1397
    %v1472 = vunpack.c.l.b16 %v1398
    %v1473 = vunpack.c.l.b16 %v1399
    %v1474 = vunpack.c.h.b16 %v1399
    %v1475 = vunpack.c.l.b16 %v1400
    %v1476 = vunpack.c.l.b16 %v1401
    %v1477 = vunpack.c.h.b16 %v1401
    %v1478 = vunpack.c.l.b16 %v1402
    %v1479 = vunpack.c.l.b16 %v1403
    %v1480 = vunpack.c.h.b16 %v1403
    %v1481 = vunpack.c.l.b16 %v1404
    %v1482 = vunpack.c.l.b16 %v1405
    %v1483 = vunpack.c.h.b16 %v1405
    %v1484 = vunpack.c.l.b16 %v1406
    %v1485 = vunpack.c.l.b16 %v1407
    %v1486 = vunpack.c.h.b16 %v1407
    %v1487 = vunpack.c.l.b16 %v1408
    %v1488 = vunpack.c.l.b16 %v1409
    %v1489 = vunpack.c.h.b16 %v1409
    %v1490 = vunpack.c.l.b16 %v1410
    %v1491 = vpack.c.b16 %v1446, %v1443
    %v1492 = vpack.c.b16 %v1447, %v1444
    %v1493 = vpack.c.b16 %v1448, %v1445
    %v1494 = vpack.c.b16 %v1452, %v1449
    %v1495 = vpack.c.b16 %v1453, %v1450
    %v1496 = vpack.c.b16 %v1454, %v1451
    %v1497 = vpack.c.b16 %v1458, %v1455
    %v1498 = vpack.c.b16 %v1459, %v1456
    %v1499 = vpack.c.b16 %v1460, %v1457
    %v1500 = vpack.c.b16 %v1464, %v1461
    %v1501 = vpack.c.b16 %v1465, %v1462
    %v1502 = vpack.c.b16 %v1466, %v1463
    %v1503 = vpack.c.b16 %v1470, %v1467
    %v1504 = vpack.c.b16 %v1471, %v1468
    %v1505 = vpack.c.b16 %v1472, %v1469
    %v1506 = vpack.c.b16 %v1476, %v1473
    %v1507 = vpack.c.b16 %v1477, %v1474
    %v1508 = vpack.c.b16 %v1478, %v1475
    %v1509 = vpack.c.b16 %v1482, %v1479
    %v1510 = vpack.c.b16 %v1483, %v1480
    %v1511 = vpack.c.b16 %v1484, %v1481
    %v1512 = vpack.c.b16 %v1488, %v1485
    %v1513 = vpack.c.b16 %v1489, %v1486
    %v1514 = vpack.c.b16 %v1490, %v1487
    %1539 = vmatprep.subr.bf16.mxu0 %v1492
    %1540 = vmatpush1.bf16.msra.mxu0 %v1491
    %1541 = vmatprep.subr.bf16.mxu0 %v1495
    %1542 = vmatpush1.bf16.msra.mxu0 %v1494
    %1543 = vmatprep.subr.bf16.mxu0 %v1498
    %1544 = vmatpush1.bf16.msra.mxu0 %v1497
    %1545 = vmatprep.subr.bf16.mxu0 %v1501
    %1546 = vmatpush1.bf16.msra.mxu0 %v1500
    %1547 = vmatprep.subr.bf16.mxu0 %v1504
    %1548 = vmatpush1.bf16.msra.mxu0 %v1503
    %1549 = vmatprep.subr.bf16.mxu0 %v1507
    %1550 = vmatpush1.bf16.msra.mxu0 %v1506
    %1551 = vmatprep.subr.bf16.mxu0 %v1510
    %1552 = vmatpush1.bf16.msra.mxu0 %v1509
    %1553 = vmatprep.subr.bf16.mxu0 %v1513
    %1554 = vmatpush1.bf16.msra.mxu0 %v1512
    %1555 = vmatprep.subr.bf16.mxu0 0
    %1556 = vmatpush1.bf16.msra.mxu0 0
    %1557 = vmatprep.subr.bf16.mxu0 0
    %1558 = vmatpush1.bf16.msra.mxu0 0
    %1559 = vmatprep.subr.bf16.mxu0 0
    %1560 = vmatpush1.bf16.msra.mxu0 0
    %1561 = vmatprep.subr.bf16.mxu0 0
    %1562 = vmatpush1.bf16.msra.mxu0 0
    %1563 = vmatprep.subr.bf16.mxu0 0
    %1564 = vmatpush1.bf16.msra.mxu0 0
    %1565 = vmatprep.subr.bf16.mxu0 0
    %1566 = vmatpush1.bf16.msra.mxu0 0
    %1567 = vmatprep.subr.bf16.mxu0 0
    %1568 = vmatpush1.bf16.msra.mxu0 0
    %1569 = vmatprep.subr.bf16.mxu0 0
    %1570 = vmatpush1.bf16.msra.mxu0 0
    %1571 = vmatprep.mubr.bf16.mxu0 0
    %1572 = vmatmul.mubr.bf16.gmra.mrb[0].mxu0 %v1377
    %v1573 = vpop.f32.mrb[0].mxu0
    %v1574 = vadd.f32 0.0, %v1573
    %v1575 = vpop.f32.mrb[0].mxu0
    %v1576 = vadd.f32 0.0, %v1575
    %v1577 = vpop.f32.mrb[0].mxu0
    %v1578 = vadd.f32 0.0, %v1577
    %v1579 = vpop.f32.mrb[0].mxu0
    %v1580 = vadd.f32 0.0, %v1579
    %1581 = vdwg.mxu0
    %1582 = vmatprep.subr.bf16.mxu0 0
    %1583 = vmatpush1.bf16.msra.mxu0 %v1493
    %1584 = vmatprep.subr.bf16.mxu0 0
    %1585 = vmatpush1.bf16.msra.mxu0 %v1496
    %1586 = vmatprep.subr.bf16.mxu0 0
    %1587 = vmatpush1.bf16.msra.mxu0 %v1499
    %1588 = vmatprep.subr.bf16.mxu0 0
    %1589 = vmatpush1.bf16.msra.mxu0 %v1502
    %1590 = vmatprep.subr.bf16.mxu0 0
    %1591 = vmatpush1.bf16.msra.mxu0 %v1505
    %1592 = vmatprep.subr.bf16.mxu0 0
    %1593 = vmatpush1.bf16.msra.mxu0 %v1508
    %1594 = vmatprep.subr.bf16.mxu0 0
    %1595 = vmatpush1.bf16.msra.mxu0 %v1511
    %1596 = vmatprep.subr.bf16.mxu0 0
    %1597 = vmatpush1.bf16.msra.mxu0 %v1514
    %1598 = vmatprep.subr.bf16.mxu0 0
    %1599 = vmatpush1.bf16.msra.mxu0 0
    %1600 = vmatprep.subr.bf16.mxu0 0
    %1601 = vmatpush1.bf16.msra.mxu0 0
    %1602 = vmatprep.subr.bf16.mxu0 0
    %1603 = vmatpush1.bf16.msra.mxu0 0
    %1604 = vmatprep.subr.bf16.mxu0 0
    %1605 = vmatpush1.bf16.msra.mxu0 0
    %1606 = vmatprep.subr.bf16.mxu0 0
    %1607 = vmatpush1.bf16.msra.mxu0 0
    %1608 = vmatprep.subr.bf16.mxu0 0
    %1609 = vmatpush1.bf16.msra.mxu0 0
    %1610 = vmatprep.subr.bf16.mxu0 0
    %1611 = vmatpush1.bf16.msra.mxu0 0
    %1612 = vmatprep.subr.bf16.mxu0 0
    %1613 = vmatpush1.bf16.msra.mxu0 0
    %1614 = vmatprep.mubr.bf16.mxu0 0
    %1615 = vmatmul.mubr.bf16.gmra.mrb[0].mxu0 %v1377
    %v1616 = vpop.f32.mrb[0].mxu0
    %v1617 = vadd.f32 0.0, %v1616
    %v1618 = vpop.f32.mrb[0].mxu0
    %v1619 = vpop.f32.mrb[0].mxu0
    %v1620 = vadd.f32 0.0, %v1619
    %v1621 = vpop.f32.mrb[0].mxu0
    %1622 = vdwg.mxu0
    %v1623 = vlaneseq
    %v1624 = vshrl.u32 %v1623, 7
    %v1625 = vsub.s32 4, %v1624
    %v1626 = vrot.slane %v1337, %v1625
    %v1627 = vadd.f32 %v1574, %v1626
    %v1628 = vadd.f32 %v1578, %v1626
    %v1629 = vlaneseq
    %v1630 = vshrl.u32 %v1629, 7
    %v1631 = vsub.s32 5, %v1630
    %v1632 = vrot.slane %v1337, %v1631
    %v1633 = vadd.f32 %v1576, %v1632
    %v1634 = vadd.f32 %v1580, %v1632
    %v1635 = vlaneseq
    %v1636 = vshrl.u32 %v1635, 7
    %v1637 = vsub.s32 6, %v1636
    %v1638 = vrot.slane %v1337, %v1637
    %v1639 = vadd.f32 %v1617, %v1638
    %v1640 = vadd.f32 %v1620, %v1638
    %v1641 = vmul.f32 %v1627, %v575
    %v1642 = vmul.f32 %v1628, %v575
    %1643 = vmatprep.subr.mxu0 0.0
    %1644 = vmatpush1.xpose.msra.mxu0 %v1633
    %1645 = vmatprep.subr.mxu0 0.0
    %1646 = vmatpush1.xpose.msra.mxu0 %v1634
    %1647 = vmatprep.subr.mxu0 0.0
    %1648 = vmatpush1.xpose.msra.mxu0 0.0
    %1649 = vmatprep.subr.mxu0 0.0
    %1650 = vmatpush1.xpose.msra.mxu0 0.0
    %1651 = vmatprep.subr.mxu0 0.0
    %1652 = vmatpush1.xpose.msra.mxu0 0.0
    %1653 = vmatprep.subr.mxu0 0.0
    %1654 = vmatpush1.xpose.msra.mxu0 0.0
    %1655 = vmatprep.subr.mxu0 0.0
    %1656 = vmatpush1.xpose.msra.mxu0 0.0
    %1657 = vmatprep.subr.mxu0 0.0
    %1658 = vmatpush1.xpose.msra.mxu0 0.0
    %1659 = vmatprep.subr.mxu0 0.0
    %1660 = vmatpush1.xpose.msra.mxu0 0.0
    %1661 = vmatprep.subr.mxu0 0.0
    %1662 = vmatpush1.xpose.msra.mxu0 0.0
    %1663 = vmatprep.subr.mxu0 0.0
    %1664 = vmatpush1.xpose.msra.mxu0 0.0
    %1665 = vmatprep.subr.mxu0 0.0
    %1666 = vmatpush1.xpose.msra.mxu0 0.0
    %1667 = vmatprep.subr.mxu0 0.0
    %1668 = vmatpush1.xpose.msra.mxu0 0.0
    %1669 = vmatprep.subr.mxu0 0.0
    %1670 = vmatpush1.xpose.msra.mxu0 0.0
    %1671 = vmatprep.subr.mxu0 0.0
    %1672 = vmatpush1.xpose.msra.mxu0 0.0
    %1673 = vmatprep.subr.mxu0 0.0
    %1674 = vmatpush1.xpose.msra.mxu0 0.0
    %1675 = vmatprep.subr.mxu0 0.0
    %1676 = vmatpush1.xpose.msra.mxu0 0.0
    %1677 = vmatprep.subr.mxu0 0.0
    %1678 = vmatpush1.xpose.msra.mxu0 0.0
    %1679 = vmatprep.subr.mxu0 0.0
    %1680 = vmatpush1.xpose.msra.mxu0 0.0
    %1681 = vmatprep.subr.mxu0 0.0
    %1682 = vmatpush1.xpose.msra.mxu0 0.0
    %1683 = vmatprep.subr.mxu0 0.0
    %1684 = vmatpush1.xpose.msra.mxu0 0.0
    %1685 = vmatprep.subr.mxu0 0.0
    %1686 = vmatpush1.xpose.msra.mxu0 0.0
    %1687 = vmatprep.subr.mxu0 0.0
    %1688 = vmatpush1.xpose.msra.mxu0 0.0
    %1689 = vmatprep.subr.mxu0 0.0
    %1690 = vmatpush1.xpose.msra.mxu0 0.0
    %1691 = vmatprep.subr.mxu0 0.0
    %1692 = vmatpush1.xpose.msra.mxu0 0.0
    %1693 = vmatprep.subr.mxu0 0.0
    %1694 = vmatpush1.xpose.msra.mxu0 0.0
    %1695 = vmatprep.subr.mxu0 0.0
    %1696 = vmatpush1.xpose.msra.mxu0 0.0
    %1697 = vmatprep.subr.mxu0 0.0
    %1698 = vmatpush1.xpose.msra.mxu0 0.0
    %1699 = vmatprep.subr.mxu0 0.0
    %1700 = vmatpush1.xpose.msra.mxu0 0.0
    %1701 = vmatprep.subr.mxu0 0.0
    %1702 = vmatpush1.xpose.msra.mxu0 0.0
    %1703 = vmatprep.subr.mxu0 0.0
    %1704 = vmatpush1.xpose.msra.mxu0 0.0
    %1705 = vmatprep.subr.mxu0 0.0
    %1706 = vmatpush1.xpose.msra.mxu0 0.0
    %1707 = vmatprep.mubr.f32.mxu0 0.0
    %1708 = vmatmul.mubr.f32.gmra.mrb[0].mxu0 %v1641
    %v1709 = vpop.f32.mrb[0].mxu0
    %v1710 = vadd.f32 %v78, %v1709
    %v1711 = vpop.f32.mrb[0].mxu0
    %1712 = vmatprep.mubr.f32.mxu0 0.0
    %1713 = vmatmul.mubr.f32.gmra.mrb[0].mxu0 %v1642
    %v1714 = vpop.f32.mrb[0].mxu0
    %v1715 = vadd.f32 %v79, %v1714
    %v1716 = vpop.f32.mrb[0].mxu0
    %1717 = vdwg.mxu0
    %v1718 = vsel %vm653, %v1710, -inf
    %1719 = vmax.xlane.f32.xlu0 %v1718
    %v1720 = vpop.xlane.xlu0 %1719
    %v1721 = vsel %vm653, %v1715, -inf
    %1722 = vmax.xlane.f32.xlu0 %v1721
    %v1723 = vpop.xlane.xlu0 %1722
    %v1724 = vsub.f32 %v1710, %v1720
    %v1725 = vsub.f32 %v1715, %v1723
    %v1726 = vmul.f32 %v1724, 1.442695
    %v1727 = vpow.pop %v1726
    %v1728 = vmul.f32 %v1725, 1.442695
    %v1729 = vpow.pop %v1728
    %v1730 = vsel %vm653, %v1727, 0.0
    %1731 = vadd.xlane.f32.xlu0 %v1730
    %v1732 = vpop.xlane.xlu0 %1731
    %v1733 = vsel %vm653, %v1729, 0.0
    %1734 = vadd.xlane.f32.xlu0 %v1733
    %v1735 = vpop.xlane.xlu0 %1734
    %v1736 = vrcp.pop %v1732
    %v1737 = vrcp.pop %v1735
    %v1738 = vmul.f32 %v1727, %v1736
    %v1739 = vmul.f32 %v1729, %v1737
    %v1740 = vmul.f32 %v1639, %v575
    %v1741 = vmul.f32 %v1640, %v575
    %v1742 = vmul.f32 %v1627, %v681
    %v1743 = vmul.f32 %v1628, %v681
    %1744 = vmatprep.subr.mxu0 0.0
    %1745 = vmatpush1.xpose.msra.mxu0 %v1633
    %1746 = vmatprep.subr.mxu0 0.0
    %1747 = vmatpush1.xpose.msra.mxu0 %v1634
    %1748 = vmatprep.subr.mxu0 0.0
    %1749 = vmatpush1.xpose.msra.mxu0 0.0
    %1750 = vmatprep.subr.mxu0 0.0
    %1751 = vmatpush1.xpose.msra.mxu0 0.0
    %1752 = vmatprep.subr.mxu0 0.0
    %1753 = vmatpush1.xpose.msra.mxu0 0.0
    %1754 = vmatprep.subr.mxu0 0.0
    %1755 = vmatpush1.xpose.msra.mxu0 0.0
    %1756 = vmatprep.subr.mxu0 0.0
    %1757 = vmatpush1.xpose.msra.mxu0 0.0
    %1758 = vmatprep.subr.mxu0 0.0
    %1759 = vmatpush1.xpose.msra.mxu0 0.0
    %1760 = vmatprep.subr.mxu0 0.0
    %1761 = vmatpush1.xpose.msra.mxu0 0.0
    %1762 = vmatprep.subr.mxu0 0.0
    %1763 = vmatpush1.xpose.msra.mxu0 0.0
    %1764 = vmatprep.subr.mxu0 0.0
    %1765 = vmatpush1.xpose.msra.mxu0 0.0
    %1766 = vmatprep.subr.mxu0 0.0
    %1767 = vmatpush1.xpose.msra.mxu0 0.0
    %1768 = vmatprep.subr.mxu0 0.0
    %1769 = vmatpush1.xpose.msra.mxu0 0.0
    %1770 = vmatprep.subr.mxu0 0.0
    %1771 = vmatpush1.xpose.msra.mxu0 0.0
    %1772 = vmatprep.subr.mxu0 0.0
    %1773 = vmatpush1.xpose.msra.mxu0 0.0
    %1774 = vmatprep.subr.mxu0 0.0
    %1775 = vmatpush1.xpose.msra.mxu0 0.0
    %1776 = vmatprep.subr.mxu0 0.0
    %1777 = vmatpush1.xpose.msra.mxu0 0.0
    %1778 = vmatprep.subr.mxu0 0.0
    %1779 = vmatpush1.xpose.msra.mxu0 0.0
    %1780 = vmatprep.subr.mxu0 0.0
    %1781 = vmatpush1.xpose.msra.mxu0 0.0
    %1782 = vmatprep.subr.mxu0 0.0
    %1783 = vmatpush1.xpose.msra.mxu0 0.0
    %1784 = vmatprep.subr.mxu0 0.0
    %1785 = vmatpush1.xpose.msra.mxu0 0.0
    %1786 = vmatprep.subr.mxu0 0.0
    %1787 = vmatpush1.xpose.msra.mxu0 0.0
    %1788 = vmatprep.subr.mxu0 0.0
    %1789 = vmatpush1.xpose.msra.mxu0 0.0
    %1790 = vmatprep.subr.mxu0 0.0
    %1791 = vmatpush1.xpose.msra.mxu0 0.0
    %1792 = vmatprep.subr.mxu0 0.0
    %1793 = vmatpush1.xpose.msra.mxu0 0.0
    %1794 = vmatprep.subr.mxu0 0.0
    %1795 = vmatpush1.xpose.msra.mxu0 0.0
    %1796 = vmatprep.subr.mxu0 0.0
    %1797 = vmatpush1.xpose.msra.mxu0 0.0
    %1798 = vmatprep.subr.mxu0 0.0
    %1799 = vmatpush1.xpose.msra.mxu0 0.0
    %1800 = vmatprep.subr.mxu0 0.0
    %1801 = vmatpush1.xpose.msra.mxu0 0.0
    %1802 = vmatprep.subr.mxu0 0.0
    %1803 = vmatpush1.xpose.msra.mxu0 0.0
    %1804 = vmatprep.subr.mxu0 0.0
    %1805 = vmatpush1.xpose.msra.mxu0 0.0
    %1806 = vmatprep.subr.mxu0 0.0
    %1807 = vmatpush1.xpose.msra.mxu0 0.0
    %1808 = vmatprep.mubr.f32.mxu0 0.0
    %1809 = vmatmul.mubr.f32.gmra.mrb[0].mxu0 %v1742
    %v1810 = vpop.f32.mrb[0].mxu0
    %v1811 = vadd.f32 %v78, %v1810
    %v1812 = vpop.f32.mrb[0].mxu0
    %1813 = vmatprep.mubr.f32.mxu0 0.0
    %1814 = vmatmul.mubr.f32.gmra.mrb[0].mxu0 %v1743
    %v1815 = vpop.f32.mrb[0].mxu0
    %v1816 = vadd.f32 %v79, %v1815
    %v1817 = vpop.f32.mrb[0].mxu0
    %1818 = vdwg.mxu0
    %v1819 = vsel %vm653, %v1811, -inf
    %1820 = vmax.xlane.f32.xlu0 %v1819
    %v1821 = vpop.xlane.xlu0 %1820
    %v1822 = vsel %vm653, %v1816, -inf
    %1823 = vmax.xlane.f32.xlu0 %v1822
    %v1824 = vpop.xlane.xlu0 %1823
    %v1825 = vsub.f32 %v1811, %v1821
    %v1826 = vsub.f32 %v1816, %v1824
    %v1827 = vmul.f32 %v1825, 1.442695
    %v1828 = vpow.pop %v1827
    %v1829 = vmul.f32 %v1826, 1.442695
    %v1830 = vpow.pop %v1829
    %v1831 = vsel %vm653, %v1828, 0.0
    %1832 = vadd.xlane.f32.xlu0 %v1831
    %v1833 = vpop.xlane.xlu0 %1832
    %v1834 = vsel %vm653, %v1830, 0.0
    %1835 = vadd.xlane.f32.xlu0 %v1834
    %v1836 = vpop.xlane.xlu0 %1835
    %v1837 = vrcp.pop %v1833
    %v1838 = vrcp.pop %v1836
    %v1839 = vmul.f32 %v1828, %v1837
    %v1840 = vmul.f32 %v1830, %v1838
    %v1841 = vmul.f32 %v1639, %v681
    %v1842 = vmul.f32 %v1640, %v681
    %v1844 = vsel %vm653, %v1839, 0
    %v1847 = vsel %vm653, %v1840, 0
    %1849 = vmatprep.subr.mxu0 0.0
    %1850 = vmatpush1.msra.mxu0 %v1841
    %1851 = vmatprep.subr.mxu0 0.0
    %1852 = vmatpush1.msra.mxu0 %v1842
    %1853 = vmatprep.subr.mxu0 0.0
    %1854 = vmatpush1.msra.mxu0 0.0
    %1855 = vmatprep.subr.mxu0 0.0
    %1856 = vmatpush1.msra.mxu0 0.0
    %1857 = vmatprep.subr.mxu0 0.0
    %1858 = vmatpush1.msra.mxu0 0.0
    %1859 = vmatprep.subr.mxu0 0.0
    %1860 = vmatpush1.msra.mxu0 0.0
    %1861 = vmatprep.subr.mxu0 0.0
    %1862 = vmatpush1.msra.mxu0 0.0
    %1863 = vmatprep.subr.mxu0 0.0
    %1864 = vmatpush1.msra.mxu0 0.0
    %1865 = vmatprep.subr.mxu0 0.0
    %1866 = vmatpush1.msra.mxu0 0.0
    %1867 = vmatprep.subr.mxu0 0.0
    %1868 = vmatpush1.msra.mxu0 0.0
    %1869 = vmatprep.subr.mxu0 0.0
    %1870 = vmatpush1.msra.mxu0 0.0
    %1871 = vmatprep.subr.mxu0 0.0
    %1872 = vmatpush1.msra.mxu0 0.0
    %1873 = vmatprep.subr.mxu0 0.0
    %1874 = vmatpush1.msra.mxu0 0.0
    %1875 = vmatprep.subr.mxu0 0.0
    %1876 = vmatpush1.msra.mxu0 0.0
    %1877 = vmatprep.subr.mxu0 0.0
    %1878 = vmatpush1.msra.mxu0 0.0
    %1879 = vmatprep.subr.mxu0 0.0
    %1880 = vmatpush1.msra.mxu0 0.0
    %1881 = vmatprep.subr.mxu0 0.0
    %1882 = vmatpush1.msra.mxu0 0.0
    %1883 = vmatprep.subr.mxu0 0.0
    %1884 = vmatpush1.msra.mxu0 0.0
    %1885 = vmatprep.subr.mxu0 0.0
    %1886 = vmatpush1.msra.mxu0 0.0
    %1887 = vmatprep.subr.mxu0 0.0
    %1888 = vmatpush1.msra.mxu0 0.0
    %1889 = vmatprep.subr.mxu0 0.0
    %1890 = vmatpush1.msra.mxu0 0.0
    %1891 = vmatprep.subr.mxu0 0.0
    %1892 = vmatpush1.msra.mxu0 0.0
    %1893 = vmatprep.subr.mxu0 0.0
    %1894 = vmatpush1.msra.mxu0 0.0
    %1895 = vmatprep.subr.mxu0 0.0
    %1896 = vmatpush1.msra.mxu0 0.0
    %1897 = vmatprep.subr.mxu0 0.0
    %1898 = vmatpush1.msra.mxu0 0.0
    %1899 = vmatprep.subr.mxu0 0.0
    %1900 = vmatpush1.msra.mxu0 0.0
    %1901 = vmatprep.subr.mxu0 0.0
    %1902 = vmatpush1.msra.mxu0 0.0
    %1903 = vmatprep.subr.mxu0 0.0
    %1904 = vmatpush1.msra.mxu0 0.0
    %1905 = vmatprep.subr.mxu0 0.0
    %1906 = vmatpush1.msra.mxu0 0.0
    %1907 = vmatprep.subr.mxu0 0.0
    %1908 = vmatpush1.msra.mxu0 0.0
    %1909 = vmatprep.subr.mxu0 0.0
    %1910 = vmatpush1.msra.mxu0 0.0
    %1911 = vmatprep.subr.mxu0 0.0
    %1912 = vmatpush1.msra.mxu0 0.0
    %1913 = vmatprep.mubr.f32.mxu0 0.0
    %1914 = vmatmul.mubr.f32.gmra.mrb[0].mxu0 %v1844
    %v1915 = vpop.f32.mrb[0].mxu0
    %v1916 = vadd.f32 0.0, %v1915
    %v1917 = vpop.f32.mrb[0].mxu0
    %1918 = vmatprep.mubr.f32.mxu0 0.0
    %1919 = vmatmul.mubr.f32.gmra.mrb[0].mxu0 %v1847
    %v1920 = vpop.f32.mrb[0].mxu0
    %v1921 = vadd.f32 0.0, %v1920
    %v1922 = vpop.f32.mrb[0].mxu0
    %1923 = vdwg.mxu0
    %v1925 = vsel %vm653, %v1738, 0
    %v1928 = vsel %vm653, %v1739, 0
    %1930 = vmatprep.subr.mxu0 0.0
    %1931 = vmatpush1.msra.mxu0 %v1740
    %1932 = vmatprep.subr.mxu0 0.0
    %1933 = vmatpush1.msra.mxu0 %v1741
    %1934 = vmatprep.subr.mxu0 0.0
    %1935 = vmatpush1.msra.mxu0 0.0
    %1936 = vmatprep.subr.mxu0 0.0
    %1937 = vmatpush1.msra.mxu0 0.0
    %1938 = vmatprep.subr.mxu0 0.0
    %1939 = vmatpush1.msra.mxu0 0.0
    %1940 = vmatprep.subr.mxu0 0.0
    %1941 = vmatpush1.msra.mxu0 0.0
    %1942 = vmatprep.subr.mxu0 0.0
    %1943 = vmatpush1.msra.mxu0 0.0
    %1944 = vmatprep.subr.mxu0 0.0
    %1945 = vmatpush1.msra.mxu0 0.0
    %1946 = vmatprep.subr.mxu0 0.0
    %1947 = vmatpush1.msra.mxu0 0.0
    %1948 = vmatprep.subr.mxu0 0.0
    %1949 = vmatpush1.msra.mxu0 0.0
    %1950 = vmatprep.subr.mxu0 0.0
    %1951 = vmatpush1.msra.mxu0 0.0
    %1952 = vmatprep.subr.mxu0 0.0
    %1953 = vmatpush1.msra.mxu0 0.0
    %1954 = vmatprep.subr.mxu0 0.0
    %1955 = vmatpush1.msra.mxu0 0.0
    %1956 = vmatprep.subr.mxu0 0.0
    %1957 = vmatpush1.msra.mxu0 0.0
    %1958 = vmatprep.subr.mxu0 0.0
    %1959 = vmatpush1.msra.mxu0 0.0
    %1960 = vmatprep.subr.mxu0 0.0
    %1961 = vmatpush1.msra.mxu0 0.0
    %1962 = vmatprep.subr.mxu0 0.0
    %1963 = vmatpush1.msra.mxu0 0.0
    %1964 = vmatprep.subr.mxu0 0.0
    %1965 = vmatpush1.msra.mxu0 0.0
    %1966 = vmatprep.subr.mxu0 0.0
    %1967 = vmatpush1.msra.mxu0 0.0
    %1968 = vmatprep.subr.mxu0 0.0
    %1969 = vmatpush1.msra.mxu0 0.0
    %1970 = vmatprep.subr.mxu0 0.0
    %1971 = vmatpush1.msra.mxu0 0.0
    %1972 = vmatprep.subr.mxu0 0.0
    %1973 = vmatpush1.msra.mxu0 0.0
    %1974 = vmatprep.subr.mxu0 0.0
    %1975 = vmatpush1.msra.mxu0 0.0
    %1976 = vmatprep.subr.mxu0 0.0
    %1977 = vmatpush1.msra.mxu0 0.0
    %1978 = vmatprep.subr.mxu0 0.0
    %1979 = vmatpush1.msra.mxu0 0.0
    %1980 = vmatprep.subr.mxu0 0.0
    %1981 = vmatpush1.msra.mxu0 0.0
    %1982 = vmatprep.subr.mxu0 0.0
    %1983 = vmatpush1.msra.mxu0 0.0
    %1984 = vmatprep.subr.mxu0 0.0
    %1985 = vmatpush1.msra.mxu0 0.0
    %1986 = vmatprep.subr.mxu0 0.0
    %1987 = vmatpush1.msra.mxu0 0.0
    %1988 = vmatprep.subr.mxu0 0.0
    %1989 = vmatpush1.msra.mxu0 0.0
    %1990 = vmatprep.subr.mxu0 0.0
    %1991 = vmatpush1.msra.mxu0 0.0
    %1992 = vmatprep.subr.mxu0 0.0
    %1993 = vmatpush1.msra.mxu0 0.0
    %1994 = vmatprep.mubr.f32.mxu0 0.0
    %1995 = vmatmul.mubr.f32.gmra.mrb[0].mxu0 %v1925
    %v1996 = vpop.f32.mrb[0].mxu0
    %v1997 = vadd.f32 %v1916, %v1996
    %v1998 = vpop.f32.mrb[0].mxu0
    %1999 = vmatprep.mubr.f32.mxu0 0.0
    %2000 = vmatmul.mubr.f32.gmra.mrb[0].mxu0 %v1928
    %v2001 = vpop.f32.mrb[0].mxu0
    %v2002 = vadd.f32 %v1921, %v2001
    %v2003 = vpop.f32.mrb[0].mxu0
    %2004 = vdwg.mxu0
    %v2005 = vpack.c.bf16 %v2002, %v1997
    %s2006 = scalar_lea.vmem %s7, 64
    %v2007 = vld [vmem:[%s2006] sm:$0xf]
    %v2008 = vld [vmem:[%s2006 + $0x4] sm:$0xf]
    %v2009 = vld [vmem:[%s2006 + $0x8] sm:$0xf]
    %v2010 = vld [vmem:[%s2006 + $0xc] sm:$0xf]
    %v2011 = vld [vmem:[%s2006 + $0x10] sm:$0xf]
    %v2012 = vld [vmem:[%s2006 + $0x14] sm:$0xf]
    %v2013 = vld [vmem:[%s2006 + $0x18] sm:$0xf]
    %v2014 = vld [vmem:[%s2006 + $0x1c] sm:$0xf]
    %v2015 = vld [vmem:[%s2006 + $0x20] sm:$0xf]
    %v2016 = vld [vmem:[%s2006 + $0x24] sm:$0xf]
    %v2017 = vld [vmem:[%s2006 + $0x28] sm:$0xf]
    %v2018 = vld [vmem:[%s2006 + $0x2c] sm:$0xf]
    %v2019 = vld [vmem:[%s2006 + $0x30] sm:$0xf]
    %v2020 = vld [vmem:[%s2006 + $0x34] sm:$0xf]
    %v2021 = vld [vmem:[%s2006 + $0x38] sm:$0xf]
    %v2022 = vld [vmem:[%s2006 + $0x3c] sm:$0xf]
    %v2039 = vunpack.c.l.b16 %v2007
    %v2040 = vunpack.c.l.b16 %v2008
    %v2041 = vunpack.c.l.b16 %v2009
    %v2042 = vunpack.c.l.b16 %v2010
    %v2043 = vunpack.c.l.b16 %v2011
    %v2044 = vunpack.c.l.b16 %v2012
    %v2045 = vunpack.c.l.b16 %v2013
    %v2046 = vunpack.c.l.b16 %v2014
    %v2047 = vunpack.c.l.b16 %v2015
    %v2048 = vunpack.c.l.b16 %v2016
    %v2049 = vunpack.c.l.b16 %v2017
    %v2050 = vunpack.c.l.b16 %v2018
    %v2051 = vunpack.c.l.b16 %v2019
    %v2052 = vunpack.c.l.b16 %v2020
    %v2053 = vunpack.c.l.b16 %v2021
    %v2054 = vunpack.c.l.b16 %v2022
    %v2055 = vpack.c.b16 %v2040, %v2039
    %v2056 = vpack.c.b16 %v2042, %v2041
    %v2057 = vpack.c.b16 %v2044, %v2043
    %v2058 = vpack.c.b16 %v2046, %v2045
    %v2059 = vpack.c.b16 %v2048, %v2047
    %v2060 = vpack.c.b16 %v2050, %v2049
    %v2061 = vpack.c.b16 %v2052, %v2051
    %v2062 = vpack.c.b16 %v2054, %v2053
    %2071 = vmatprep.subr.bf16.mxu0 0
    %2072 = vmatpush1.bf16.msra.mxu0 %v2055
    %2073 = vmatprep.subr.bf16.mxu0 0
    %2074 = vmatpush1.bf16.msra.mxu0 %v2056
    %2075 = vmatprep.subr.bf16.mxu0 0
    %2076 = vmatpush1.bf16.msra.mxu0 %v2057
    %2077 = vmatprep.subr.bf16.mxu0 0
    %2078 = vmatpush1.bf16.msra.mxu0 %v2058
    %2079 = vmatprep.subr.bf16.mxu0 0
    %2080 = vmatpush1.bf16.msra.mxu0 %v2059
    %2081 = vmatprep.subr.bf16.mxu0 0
    %2082 = vmatpush1.bf16.msra.mxu0 %v2060
    %2083 = vmatprep.subr.bf16.mxu0 0
    %2084 = vmatpush1.bf16.msra.mxu0 %v2061
    %2085 = vmatprep.subr.bf16.mxu0 0
    %2086 = vmatpush1.bf16.msra.mxu0 %v2062
    %2087 = vmatprep.subr.bf16.mxu0 0
    %2088 = vmatpush1.bf16.msra.mxu0 0
    %2089 = vmatprep.subr.bf16.mxu0 0
    %2090 = vmatpush1.bf16.msra.mxu0 0
    %2091 = vmatprep.subr.bf16.mxu0 0
    %2092 = vmatpush1.bf16.msra.mxu0 0
    %2093 = vmatprep.subr.bf16.mxu0 0
    %2094 = vmatpush1.bf16.msra.mxu0 0
    %2095 = vmatprep.subr.bf16.mxu0 0
    %2096 = vmatpush1.bf16.msra.mxu0 0
    %2097 = vmatprep.subr.bf16.mxu0 0
    %2098 = vmatpush1.bf16.msra.mxu0 0
    %2099 = vmatprep.subr.bf16.mxu0 0
    %2100 = vmatpush1.bf16.msra.mxu0 0
    %2101 = vmatprep.subr.bf16.mxu0 0
    %2102 = vmatpush1.bf16.msra.mxu0 0
    %2103 = vmatprep.mubr.bf16.mxu0 0
    %2104 = vmatmul.mubr.bf16.gmra.mrb[0].mxu0 %v2005
    %v2105 = vpop.f32.mrb[0].mxu0
    %v2106 = vadd.f32 0.0, %v2105
    %v2107 = vpop.f32.mrb[0].mxu0
    %v2108 = vpop.f32.mrb[0].mxu0
    %v2109 = vadd.f32 0.0, %v2108
    %v2110 = vpop.f32.mrb[0].mxu0
    %2111 = vdwg.mxu0
    %v2112 = vadd.f32 %v1334, %v2106
    %v2113 = vadd.f32 %v1335, %v2109
    %v2114 = vlaneseq
    %v2115 = vshrl.u32 %v2114, 7
    %v2116 = vsub.s32 7, %v2115
    %v2117 = vrot.slane %v1337, %v2116
    %v2118 = vadd.f32 %v2112, %v2117
    %v2119 = vadd.f32 %v2113, %v2117
    %2120 = vadd.xlane.f32.xlu0 %v2118
    %v2121 = vpop.xlane.xlu0 %2120
    %2122 = vadd.xlane.f32.xlu0 %v2119
    %v2123 = vpop.xlane.xlu0 %2122
    %v2124 = vmul.f32 %v2121, 0.03125
    %v2125 = vmul.f32 %v2123, 0.03125
    %v2126 = vmul.f32 %v2118, %v2118
    %v2127 = vmul.f32 %v2119, %v2119
    %2128 = vadd.xlane.f32.xlu0 %v2126
    %v2129 = vpop.xlane.xlu0 %2128
    %2130 = vadd.xlane.f32.xlu0 %v2127
    %v2131 = vpop.xlane.xlu0 %2130
    %v2132 = vmul.f32 %v2129, 0.03125
    %v2133 = vmul.f32 %v2131, 0.03125
    %v2134 = vmul.f32 %v2124, %v2124
    %v2135 = vmul.f32 %v2125, %v2125
    %v2136 = vsub.f32 %v2132, %v2134
    %v2137 = vsub.f32 %v2133, %v2135
    %v2138 = vsub.f32 %v2118, %v2124
    %v2139 = vsub.f32 %v2119, %v2125
    %v2140 = vadd.f32 %v2136, 1e-05
    %v2141 = vadd.f32 %v2137, 1e-05
    %v2142 = vrsqrt.pop %v2140
    %v2143 = vrsqrt.pop %v2141
    %v2144 = vmul.f32 %v2138, %v2142
    %v2145 = vmul.f32 %v2139, %v2143
    %v2146 = vlaneseq
    %v2147 = vshrl.u32 %v2146, 7
    %v2148 = vsub.s32 2, %v2147
    %v2149 = vrot.slane %v1337, %v2148
    %v2150 = vmul.f32 %v2144, %v2149
    %v2151 = vmul.f32 %v2145, %v2149
    %v2152 = vlaneseq
    %v2153 = vshrl.u32 %v2152, 7
    %v2154 = vsub.s32 3, %v2153
    %v2155 = vrot.slane %v1337, %v2154
    %v2156 = vadd.f32 %v2150, %v2155
    %v2157 = vadd.f32 %v2151, %v2155
    %v2158 = vpack.c.bf16 %v2157, %v2156
    %s2159 = scalar_lea.vmem %s8, 128
    %v2160 = vld [vmem:[%s2159] sm:$0xf]
    %v2161 = vld [vmem:[%s2159 + $0x4] sm:$0xf]
    %v2162 = vld [vmem:[%s2159 + $0x8] sm:$0xf]
    %v2163 = vld [vmem:[%s2159 + $0xc] sm:$0xf]
    %v2164 = vld [vmem:[%s2159 + $0x10] sm:$0xf]
    %v2165 = vld [vmem:[%s2159 + $0x14] sm:$0xf]
    %v2166 = vld [vmem:[%s2159 + $0x18] sm:$0xf]
    %v2167 = vld [vmem:[%s2159 + $0x1c] sm:$0xf]
    %v2168 = vld [vmem:[%s2159 + $0x20] sm:$0xf]
    %v2169 = vld [vmem:[%s2159 + $0x24] sm:$0xf]
    %v2170 = vld [vmem:[%s2159 + $0x28] sm:$0xf]
    %v2171 = vld [vmem:[%s2159 + $0x2c] sm:$0xf]
    %v2172 = vld [vmem:[%s2159 + $0x30] sm:$0xf]
    %v2173 = vld [vmem:[%s2159 + $0x34] sm:$0xf]
    %v2174 = vld [vmem:[%s2159 + $0x38] sm:$0xf]
    %v2175 = vld [vmem:[%s2159 + $0x3c] sm:$0xf]
    %v2176 = vlaneseq
    %v2177 = vshrl.u32 %v2176, 7
    %v2178 = vsub.s32 0, %v2177
    %v2179 = vrot.slane %v1338, %v2178
    %v2196 = vunpack.c.l.b16 %v2160
    %v2197 = vunpack.c.l.b16 %v2161
    %v2198 = vunpack.c.l.b16 %v2162
    %v2199 = vunpack.c.l.b16 %v2163
    %v2200 = vunpack.c.l.b16 %v2164
    %v2201 = vunpack.c.l.b16 %v2165
    %v2202 = vunpack.c.l.b16 %v2166
    %v2203 = vunpack.c.l.b16 %v2167
    %v2204 = vunpack.c.l.b16 %v2168
    %v2205 = vunpack.c.l.b16 %v2169
    %v2206 = vunpack.c.l.b16 %v2170
    %v2207 = vunpack.c.l.b16 %v2171
    %v2208 = vunpack.c.l.b16 %v2172
    %v2209 = vunpack.c.l.b16 %v2173
    %v2210 = vunpack.c.l.b16 %v2174
    %v2211 = vunpack.c.l.b16 %v2175
    %v2212 = vpack.c.b16 %v2197, %v2196
    %v2213 = vpack.c.b16 %v2199, %v2198
    %v2214 = vpack.c.b16 %v2201, %v2200
    %v2215 = vpack.c.b16 %v2203, %v2202
    %v2216 = vpack.c.b16 %v2205, %v2204
    %v2217 = vpack.c.b16 %v2207, %v2206
    %v2218 = vpack.c.b16 %v2209, %v2208
    %v2219 = vpack.c.b16 %v2211, %v2210
    %2228 = vmatprep.subr.bf16.mxu0 0
    %2229 = vmatpush1.bf16.msra.mxu0 %v2212
    %2230 = vmatprep.subr.bf16.mxu0 0
    %2231 = vmatpush1.bf16.msra.mxu0 %v2213
    %2232 = vmatprep.subr.bf16.mxu0 0
    %2233 = vmatpush1.bf16.msra.mxu0 %v2214
    %2234 = vmatprep.subr.bf16.mxu0 0
    %2235 = vmatpush1.bf16.msra.mxu0 %v2215
    %2236 = vmatprep.subr.bf16.mxu0 0
    %2237 = vmatpush1.bf16.msra.mxu0 %v2216
    %2238 = vmatprep.subr.bf16.mxu0 0
    %2239 = vmatpush1.bf16.msra.mxu0 %v2217
    %2240 = vmatprep.subr.bf16.mxu0 0
    %2241 = vmatpush1.bf16.msra.mxu0 %v2218
    %2242 = vmatprep.subr.bf16.mxu0 0
    %2243 = vmatpush1.bf16.msra.mxu0 %v2219
    %2244 = vmatprep.subr.bf16.mxu0 0
    %2245 = vmatpush1.bf16.msra.mxu0 0
    %2246 = vmatprep.subr.bf16.mxu0 0
    %2247 = vmatpush1.bf16.msra.mxu0 0
    %2248 = vmatprep.subr.bf16.mxu0 0
    %2249 = vmatpush1.bf16.msra.mxu0 0
    %2250 = vmatprep.subr.bf16.mxu0 0
    %2251 = vmatpush1.bf16.msra.mxu0 0
    %2252 = vmatprep.subr.bf16.mxu0 0
    %2253 = vmatpush1.bf16.msra.mxu0 0
    %2254 = vmatprep.subr.bf16.mxu0 0
    %2255 = vmatpush1.bf16.msra.mxu0 0
    %2256 = vmatprep.subr.bf16.mxu0 0
    %2257 = vmatpush1.bf16.msra.mxu0 0
    %2258 = vmatprep.subr.bf16.mxu0 0
    %2259 = vmatpush1.bf16.msra.mxu0 0
    %2260 = vmatprep.mubr.bf16.mxu0 0
    %2261 = vmatmul.mubr.bf16.gmra.mrb[0].mxu0 %v2158
    %v2262 = vpop.f32.mrb[0].mxu0
    %v2263 = vadd.f32 %v2179, %v2262
    %v2264 = vpop.f32.mrb[0].mxu0
    %v2265 = vpop.f32.mrb[0].mxu0
    %v2266 = vadd.f32 %v2179, %v2265
    %v2267 = vpop.f32.mrb[0].mxu0
    %2268 = vdwg.mxu0
    %v2269 = vmul.f32 %v2263, 1.702
    %v2270 = vmul.f32 %v2266, 1.702
    %v2271 = vxor.u32 %v2269, 2147483648
    %v2272 = vxor.u32 %v2270, 2147483648
    %v2273 = vmul.f32 %v2271, 1.442695
    %v2274 = vpow.pop %v2273
    %v2275 = vmul.f32 %v2272, 1.442695
    %v2276 = vpow.pop %v2275
    %v2277 = vadd.f32 %v2274, 1.0
    %v2278 = vadd.f32 %v2276, 1.0
    %v2279 = vrcp.pop %v2277
    %v2280 = vmul.f32 1.0, %v2279
    %v2281 = vrcp.pop %v2278
    %v2282 = vmul.f32 1.0, %v2281
    %v2283 = vmul.f32 %v2263, %v2280
    %v2284 = vmul.f32 %v2266, %v2282
    %v2285 = vpack.c.bf16 %v2284, %v2283
    %s2286 = scalar_lea.vmem %s8, 192
    %v2287 = vld [vmem:[%s2286] sm:$0xf]
    %v2288 = vld [vmem:[%s2286 + $0x4] sm:$0xf]
    %v2289 = vld [vmem:[%s2286 + $0x8] sm:$0xf]
    %v2290 = vld [vmem:[%s2286 + $0xc] sm:$0xf]
    %v2291 = vld [vmem:[%s2286 + $0x10] sm:$0xf]
    %v2292 = vld [vmem:[%s2286 + $0x14] sm:$0xf]
    %v2293 = vld [vmem:[%s2286 + $0x18] sm:$0xf]
    %v2294 = vld [vmem:[%s2286 + $0x1c] sm:$0xf]
    %v2295 = vld [vmem:[%s2286 + $0x20] sm:$0xf]
    %v2296 = vld [vmem:[%s2286 + $0x24] sm:$0xf]
    %v2297 = vld [vmem:[%s2286 + $0x28] sm:$0xf]
    %v2298 = vld [vmem:[%s2286 + $0x2c] sm:$0xf]
    %v2299 = vld [vmem:[%s2286 + $0x30] sm:$0xf]
    %v2300 = vld [vmem:[%s2286 + $0x34] sm:$0xf]
    %v2301 = vld [vmem:[%s2286 + $0x38] sm:$0xf]
    %v2302 = vld [vmem:[%s2286 + $0x3c] sm:$0xf]
    %v2303 = vlaneseq
    %v2304 = vshrl.u32 %v2303, 7
    %v2305 = vsub.s32 1, %v2304
    %v2306 = vrot.slane %v1338, %v2305
    %v2323 = vunpack.c.l.b16 %v2287
    %v2324 = vunpack.c.l.b16 %v2288
    %v2325 = vunpack.c.l.b16 %v2289
    %v2326 = vunpack.c.l.b16 %v2290
    %v2327 = vunpack.c.l.b16 %v2291
    %v2328 = vunpack.c.l.b16 %v2292
    %v2329 = vunpack.c.l.b16 %v2293
    %v2330 = vunpack.c.l.b16 %v2294
    %v2331 = vunpack.c.l.b16 %v2295
    %v2332 = vunpack.c.l.b16 %v2296
    %v2333 = vunpack.c.l.b16 %v2297
    %v2334 = vunpack.c.l.b16 %v2298
    %v2335 = vunpack.c.l.b16 %v2299
    %v2336 = vunpack.c.l.b16 %v2300
    %v2337 = vunpack.c.l.b16 %v2301
    %v2338 = vunpack.c.l.b16 %v2302
    %v2339 = vpack.c.b16 %v2324, %v2323
    %v2340 = vpack.c.b16 %v2326, %v2325
    %v2341 = vpack.c.b16 %v2328, %v2327
    %v2342 = vpack.c.b16 %v2330, %v2329
    %v2343 = vpack.c.b16 %v2332, %v2331
    %v2344 = vpack.c.b16 %v2334, %v2333
    %v2345 = vpack.c.b16 %v2336, %v2335
    %v2346 = vpack.c.b16 %v2338, %v2337
    %2355 = vmatprep.subr.bf16.mxu0 0
    %2356 = vmatpush1.bf16.msra.mxu0 %v2339
    %2357 = vmatprep.subr.bf16.mxu0 0
    %2358 = vmatpush1.bf16.msra.mxu0 %v2340
    %2359 = vmatprep.subr.bf16.mxu0 0
    %2360 = vmatpush1.bf16.msra.mxu0 %v2341
    %2361 = vmatprep.subr.bf16.mxu0 0
    %2362 = vmatpush1.bf16.msra.mxu0 %v2342
    %2363 = vmatprep.subr.bf16.mxu0 0
    %2364 = vmatpush1.bf16.msra.mxu0 %v2343
    %2365 = vmatprep.subr.bf16.mxu0 0
    %2366 = vmatpush1.bf16.msra.mxu0 %v2344
    %2367 = vmatprep.subr.bf16.mxu0 0
    %2368 = vmatpush1.bf16.msra.mxu0 %v2345
    %2369 = vmatprep.subr.bf16.mxu0 0
    %2370 = vmatpush1.bf16.msra.mxu0 %v2346
    %2371 = vmatprep.subr.bf16.mxu0 0
    %2372 = vmatpush1.bf16.msra.mxu0 0
    %2373 = vmatprep.subr.bf16.mxu0 0
    %2374 = vmatpush1.bf16.msra.mxu0 0
    %2375 = vmatprep.subr.bf16.mxu0 0
    %2376 = vmatpush1.bf16.msra.mxu0 0
    %2377 = vmatprep.subr.bf16.mxu0 0
    %2378 = vmatpush1.bf16.msra.mxu0 0
    %2379 = vmatprep.subr.bf16.mxu0 0
    %2380 = vmatpush1.bf16.msra.mxu0 0
    %2381 = vmatprep.subr.bf16.mxu0 0
    %2382 = vmatpush1.bf16.msra.mxu0 0
    %2383 = vmatprep.subr.bf16.mxu0 0
    %2384 = vmatpush1.bf16.msra.mxu0 0
    %2385 = vmatprep.subr.bf16.mxu0 0
    %2386 = vmatpush1.bf16.msra.mxu0 0
    %2387 = vmatprep.mubr.bf16.mxu0 0
    %2388 = vmatmul.mubr.bf16.gmra.mrb[0].mxu0 %v2285
    %v2389 = vpop.f32.mrb[0].mxu0
    %v2390 = vadd.f32 %v2306, %v2389
    %v2391 = vpop.f32.mrb[0].mxu0
    %v2392 = vpop.f32.mrb[0].mxu0
    %v2393 = vadd.f32 %v2306, %v2392
    %v2394 = vpop.f32.mrb[0].mxu0
    %2395 = vdwg.mxu0
    %v2396 = vadd.f32 %v2118, %v2390
    %v2397 = vadd.f32 %v2119, %v2393
    %2398 = vadd.xlane.f32.xlu0 %v2396
    %v2399 = vpop.xlane.xlu0 %2398
    %2400 = vadd.xlane.f32.xlu0 %v2397
    %v2401 = vpop.xlane.xlu0 %2400
    %v2402 = vmul.f32 %v2399, 0.03125
    %v2403 = vmul.f32 %v2401, 0.03125
    %v2404 = vmul.f32 %v2396, %v2396
    %v2405 = vmul.f32 %v2397, %v2397
    %2406 = vadd.xlane.f32.xlu0 %v2404
    %v2407 = vpop.xlane.xlu0 %2406
    %2408 = vadd.xlane.f32.xlu0 %v2405
    %v2409 = vpop.xlane.xlu0 %2408
    %v2410 = vmul.f32 %v2407, 0.03125
    %v2411 = vmul.f32 %v2409, 0.03125
    %v2412 = vmul.f32 %v2402, %v2402
    %v2413 = vmul.f32 %v2403, %v2403
    %v2414 = vsub.f32 %v2410, %v2412
    %v2415 = vsub.f32 %v2411, %v2413
    %v2416 = vsub.f32 %v2396, %v2402
    %v2417 = vsub.f32 %v2397, %v2403
    %v2418 = vadd.f32 %v2414, 1e-05
    %v2419 = vadd.f32 %v2415, 1e-05
    %v2420 = vrsqrt.pop %v2418
    %v2421 = vrsqrt.pop %v2419
    %v2422 = vmul.f32 %v2416, %v2420
    %v2423 = vmul.f32 %v2417, %v2421
    %v2424 = vlaneseq
    %v2425 = vshrl.u32 %v2424, 7
    %v2426 = vsub.s32 2, %v2425
    %v2427 = vrot.slane %v77, %v2426
    %v2428 = vmul.f32 %v2422, %v2427
    %v2429 = vmul.f32 %v2423, %v2427
    %v2430 = vlaneseq
    %v2431 = vshrl.u32 %v2430, 7
    %v2432 = vsub.s32 3, %v2431
    %v2433 = vrot.slane %v77, %v2432
    %v2434 = vadd.f32 %v2428, %v2433
    %v2435 = vadd.f32 %v2429, %v2433
    %v2436 = vpack.c.bf16 %v2435, %v2434
    %v2437 = vld [vmem:[%s9] sm:$0xf]
    %v2438 = vld [vmem:[%s9 + $0x4] sm:$0xf]
    %v2439 = vld [vmem:[%s9 + $0x8] sm:$0xf]
    %v2440 = vld [vmem:[%s9 + $0xc] sm:$0xf]
    %v2441 = vld [vmem:[%s9 + $0x10] sm:$0xf]
    %v2442 = vld [vmem:[%s9 + $0x14] sm:$0xf]
    %v2443 = vld [vmem:[%s9 + $0x18] sm:$0xf]
    %v2444 = vld [vmem:[%s9 + $0x1c] sm:$0xf]
    %v2445 = vld [vmem:[%s9 + $0x20] sm:$0xf]
    %v2446 = vld [vmem:[%s9 + $0x24] sm:$0xf]
    %v2447 = vld [vmem:[%s9 + $0x28] sm:$0xf]
    %v2448 = vld [vmem:[%s9 + $0x2c] sm:$0xf]
    %v2449 = vld [vmem:[%s9 + $0x30] sm:$0xf]
    %v2450 = vld [vmem:[%s9 + $0x34] sm:$0xf]
    %v2451 = vld [vmem:[%s9 + $0x38] sm:$0xf]
    %v2452 = vld [vmem:[%s9 + $0x3c] sm:$0xf]
    %v2469 = vunpack.c.l.b16 %v2437
    %v2470 = vunpack.c.l.b16 %v2438
    %v2471 = vunpack.c.l.b16 %v2439
    %v2472 = vunpack.c.l.b16 %v2440
    %v2473 = vunpack.c.l.b16 %v2441
    %v2474 = vunpack.c.l.b16 %v2442
    %v2475 = vunpack.c.l.b16 %v2443
    %v2476 = vunpack.c.l.b16 %v2444
    %v2477 = vunpack.c.l.b16 %v2445
    %v2478 = vunpack.c.l.b16 %v2446
    %v2479 = vunpack.c.l.b16 %v2447
    %v2480 = vunpack.c.l.b16 %v2448
    %v2481 = vunpack.c.l.b16 %v2449
    %v2482 = vunpack.c.l.b16 %v2450
    %v2483 = vunpack.c.l.b16 %v2451
    %v2484 = vunpack.c.l.b16 %v2452
    %v2485 = vpack.c.b16 %v2470, %v2469
    %v2486 = vpack.c.b16 %v2472, %v2471
    %v2487 = vpack.c.b16 %v2474, %v2473
    %v2488 = vpack.c.b16 %v2476, %v2475
    %v2489 = vpack.c.b16 %v2478, %v2477
    %v2490 = vpack.c.b16 %v2480, %v2479
    %v2491 = vpack.c.b16 %v2482, %v2481
    %v2492 = vpack.c.b16 %v2484, %v2483
    %2501 = vmatprep.subr.bf16.mxu0 0
    %2502 = vmatpush1.bf16.msra.mxu0 %v2485
    %2503 = vmatprep.subr.bf16.mxu0 0
    %2504 = vmatpush1.bf16.msra.mxu0 %v2486
    %2505 = vmatprep.subr.bf16.mxu0 0
    %2506 = vmatpush1.bf16.msra.mxu0 %v2487
    %2507 = vmatprep.subr.bf16.mxu0 0
    %2508 = vmatpush1.bf16.msra.mxu0 %v2488
    %2509 = vmatprep.subr.bf16.mxu0 0
    %2510 = vmatpush1.bf16.msra.mxu0 %v2489
    %2511 = vmatprep.subr.bf16.mxu0 0
    %2512 = vmatpush1.bf16.msra.mxu0 %v2490
    %2513 = vmatprep.subr.bf16.mxu0 0
    %2514 = vmatpush1.bf16.msra.mxu0 %v2491
    %2515 = vmatprep.subr.bf16.mxu0 0
    %2516 = vmatpush1.bf16.msra.mxu0 %v2492
    %2517 = vmatprep.subr.bf16.mxu0 0
    %2518 = vmatpush1.bf16.msra.mxu0 0
    %2519 = vmatprep.subr.bf16.mxu0 0
    %2520 = vmatpush1.bf16.msra.mxu0 0
    %2521 = vmatprep.subr.bf16.mxu0 0
    %2522 = vmatpush1.bf16.msra.mxu0 0
    %2523 = vmatprep.subr.bf16.mxu0 0
    %2524 = vmatpush1.bf16.msra.mxu0 0
    %2525 = vmatprep.subr.bf16.mxu0 0
    %2526 = vmatpush1.bf16.msra.mxu0 0
    %2527 = vmatprep.subr.bf16.mxu0 0
    %2528 = vmatpush1.bf16.msra.mxu0 0
    %2529 = vmatprep.subr.bf16.mxu0 0
    %2530 = vmatpush1.bf16.msra.mxu0 0
    %2531 = vmatprep.subr.bf16.mxu0 0
    %2532 = vmatpush1.bf16.msra.mxu0 0
    %2533 = vmatprep.mubr.bf16.mxu0 0
    %2534 = vmatmul.mubr.bf16.gmra.mrb[0].mxu0 %v2436
    %v2535 = vpop.f32.mrb[0].mxu0
    %v2536 = vadd.f32 0.0, %v2535
    %v2537 = vpop.f32.mrb[0].mxu0
    %v2538 = vpop.f32.mrb[0].mxu0
    %v2539 = vadd.f32 0.0, %v2538
    %v2540 = vpop.f32.mrb[0].mxu0
    %2541 = vdwg.mxu0
    %2542 = vst [vmem:[%s10] sm:$0xff] %v2536
    %2543 = vst [vmem:[%s10 + $0x8] sm:$0xff] %v2539
    // Predicated region
    $region54: #{encode_image.1} parent=1 // pred_check
      _
    $region55: #{encode_image.1} parent=1 // pred_check_branch
      %2545 = sbr.rel (0) target = $region57
    $region56: #{encode_image.1} parent=1 // pred_region
      _
    $region57: #{encode_image.1} parent=1 // pred_fallthru
      _
    // Predicated region
    $region58: #{encode_image.1} parent=1 // pred_check
      _
    $region59: #{encode_image.1} parent=1 // pred_check_branch
      %2547 = sbr.rel (0) target = $region61
    $region60: #{encode_image.1} parent=1 // pred_region
      _
    $region61: #{encode_image.1} parent=1 // pred_fallthru
      _
    %2548 = vsyncpa [#allocation3], 1
    %2549 = vsyncpa [#allocation5], 1

</llo_original>
